<compile_context>
chip_gen: v6e
topology: v6e:2x2x1
jax: 0.10.0
libtpu: 0.0.40
codegen_flags: <defaults>
</compile_context>

<pallas_src>
import math

import jax
import jax.numpy as jnp
from jax.experimental import pallas as pl
from jax.experimental.pallas import tpu as pltpu

# ---- small, forward-consistent hyper-parameters -----------------------------
B = 2              # batch
S = 8              # sequence length (visits)
BS = B * S         # flattened rows processed by the single kernel invocation
D_LONG = 3         # longitudinal outcomes
D_BASE = 2         # baseline covariates
D_MODEL = 32
NHEAD = 4
DH = D_MODEL // NHEAD
D_FF = 2 * D_MODEL
NUM_LAYERS = 2
LN_EPS = 1e-5      # PyTorch nn.LayerNorm default
NEG_INF = -1e9     # same constant as masked_fill(mask == 0, -1e9)


# ---- in-kernel helpers -------------------------------------------------------
def _layernorm(x, gamma, beta):
    mean = jnp.mean(x, axis=-1, keepdims=True)
    var = jnp.mean((x - mean) ** 2, axis=-1, keepdims=True)
    return (x - mean) * jax.lax.rsqrt(var + LN_EPS) * gamma + beta


def _bf16(x):
    return x.astype(jnp.bfloat16)


# ---- the single fused kernel -------------------------------------------------
def decoder_fused_kernel(long_ref, base_ref, pe_ref, mask_ref,
                         ew1l_ref, ew1b_ref, eb1_ref, eg_ref, ebt_ref,
                         ew2_ref, eb2_ref,
                         wqkv_ref, bqkv_ref, wo_ref, bo_ref,
                         g1_ref, b1_ref, wf1_ref, bf1_ref,
                         wf2_ref, bf2_ref, g2_ref, b2_ref,
                         out_ref, ctx_ref):
    # ---- block-diagonal additive mask built in-kernel (pure VPU work) -------
    # mask_ref is the module's (B, S, S) keep(1)/drop(0) mask flattened to
    # (B*S, S): row r holds the key-mask of query r over its own batch's keys.
    row = jax.lax.broadcasted_iota(jnp.int32, (BS, BS), 0)
    col = jax.lax.broadcasted_iota(jnp.int32, (BS, BS), 1)
    if (S & (S - 1)) == 0:                     # batch id via shift (S power of 2)
        shift = S.bit_length() - 1
        same_batch = (row >> shift) == (col >> shift)
    else:
        same_batch = (row // S) == (col // S)
    mwide = jnp.tile(mask_ref[...], (1, B))    # (BS, B*S): column c -> mask[r, c % S]
    keep = jnp.logical_and(mwide > 0.0, same_batch)
    # Cross-batch and dropped entries get -1e9 (same softmax effect as
    # masked_fill(mask==0, -1e9)); the causal diagonal keeps every row alive.
    mask_add = jnp.where(keep, jnp.float32(0.0), jnp.float32(NEG_INF))

    # ---- embedding MLP over all B*S rows (concat avoided by splitting W1) ----
    h = (jnp.dot(long_ref[...], ew1l_ref[...], preferred_element_type=jnp.float32)
         + jnp.dot(base_ref[...], ew1b_ref[...], preferred_element_type=jnp.float32)
         + eb1_ref[...])
    h = jnp.maximum(h, 0.0)                          # ReLU; Dropout(0.2)=identity (eval)
    h = _layernorm(h, eg_ref[...], ebt_ref[...])     # LayerNorm(d_model)
    x = (jnp.dot(_bf16(h), ew2_ref[...], preferred_element_type=jnp.float32)
         + eb2_ref[...] + pe_ref[...])               # + positional encoding  (BS, D_MODEL)

    xb = _bf16(x)                                    # hoisted: every layer consumes x
    decoding = x
    for l in range(NUM_LAYERS):                      # static unroll over layers
        # Mirrors the PyTorch loop exactly: every layer consumes the embedded
        # input `x` (layer(x, x, mask)); `decoding` keeps the LAST layer's output.
        qkv = (jnp.dot(xb, wqkv_ref[l], preferred_element_type=jnp.float32)
               + bqkv_ref[l])                        # fused QKV -> (BS, 3*D_MODEL), f32
        q = _bf16(qkv[:, :D_MODEL])                  # 1/sqrt(DH) folded into Wq/bq on host
        k = _bf16(qkv[:, D_MODEL:2 * D_MODEL])
        v = _bf16(qkv[:, 2 * D_MODEL:])

        # Per-head scores/context; each head's output lands at its lane offset
        # in the VMEM scratch, then ONE Wo matmul (no per-head MRF-pop adds,
        # no sub-lane Wo slices).
        for hh in range(NHEAD):                      # static unroll over heads
            sl = slice(hh * DH, (hh + 1) * DH)
            s = jax.lax.dot_general(q[:, sl], k[:, sl],
                                    (((1,), (1,)), ((), ())),
                                    preferred_element_type=jnp.float32)   # (BS, BS)
            s = s + mask_add                         # additive mask (no compare/select)
            s = s - jnp.max(s, axis=-1, keepdims=True)
            p = jnp.exp(s)
            p = p * pl.reciprocal(jnp.sum(p, axis=-1, keepdims=True), approx=True)
            head = jnp.dot(_bf16(p), v[:, sl],
                           preferred_element_type=jnp.float32)            # (BS, DH)
            ctx_ref[:, sl] = head                    # lane-offset store into scratch

        attn = (jnp.dot(_bf16(ctx_ref[...]), wo_ref[l],
                        preferred_element_type=jnp.float32) + bo_ref[l])

        h1 = _layernorm(x + attn, g1_ref[l], b1_ref[l])                   # residual + LN
        ff = (jnp.dot(_bf16(h1), wf1_ref[l], preferred_element_type=jnp.float32)
              + bf1_ref[l])
        ff = jnp.maximum(ff, 0.0)
        ff = (jnp.dot(_bf16(ff), wf2_ref[l], preferred_element_type=jnp.float32)
              + bf2_ref[l])
        decoding = _layernorm(h1 + ff, g2_ref[l], b2_ref[l])              # residual + LN

    out_ref[...] = decoding                          # single (BS, D_MODEL) store


# ---- host-side helpers --------------------------------------------------------
def positional_encoding(batch, length, d_model, obs_time):
    # PE[..., 2i]   = sin(obs_time / 10000**(2i/d_model))
    # PE[..., 2i+1] = cos(obs_time / 10000**(2i/d_model))
    idx = jnp.arange(d_model)
    exponent = (idx - (idx % 2)).astype(jnp.float32) / d_model
    denom = jnp.power(10000.0, exponent)
    angle = obs_time[:, :, None] / denom[None, None, :]
    return jnp.where((idx % 2 == 0)[None, None, :],
                     jnp.sin(angle), jnp.cos(angle)).astype(jnp.float32)


@jax.jit
def decoder_forward(long, base, mask, obs_time, packed):
    b, s = long.shape[0], long.shape[1]
    pe = positional_encoding(b, s, D_MODEL, obs_time).reshape(b * s, D_MODEL)
    # Only O(B*S*S) of mask bytes cross HBM; the (BS, BS) block-diagonal
    # additive form is generated inside the kernel from iota comparisons.
    mask_rows = mask.reshape(b * s, s).astype(jnp.float32)
    out = pl.pallas_call(
        decoder_fused_kernel,
        out_shape=jax.ShapeDtypeStruct((b * s, D_MODEL), jnp.float32),
        # No grid: single invocation, all params + activations resident in VMEM.
        scratch_shapes=[pltpu.VMEM((BS, D_MODEL), jnp.float32)],   # per-layer head ctx
        cost_estimate=pl.CostEstimate(flops=660_000, transcendentals=2_300,
                                      bytes_accessed=60_000),
    )(long.reshape(b * s, D_LONG).astype(jnp.bfloat16),
      base.reshape(b * s, D_BASE).astype(jnp.bfloat16),
      pe, mask_rows,
      packed["e_w1l"], packed["e_w1b"], packed["e_b1"],
      packed["e_g"], packed["e_beta"], packed["e_w2"], packed["e_b2"],
      packed["wqkv"], packed["bqkv"], packed["wo"], packed["bo"],
      packed["ln1_g"], packed["ln1_b"], packed["wf1"], packed["bf1"],
      packed["wf2"], packed["bf2"], packed["ln2_g"], packed["ln2_b"])
    return out.reshape(b, s, D_MODEL)


def pack_params(params):
    """One-time host-side packing: split the embedding W1 (removes the cat),
    fuse Wq|Wk|Wv (+biases) into one (D_MODEL, 3*D_MODEL) weight with the
    1/sqrt(DH) scale folded into the Q projection, stack per-layer weights on a
    leading NUM_LAYERS axis, and cast all weight matrices to bf16 (biases / LN
    params stay f32; accumulation in-kernel is f32)."""
    emb = params["embed"]
    scale = 1.0 / math.sqrt(DH)

    def stack(fn):
        return jnp.stack([fn(lp) for lp in params["layers"]], axis=0)

    bf = lambda a: a.astype(jnp.bfloat16)

    return dict(
        e_w1l=bf(emb["w1"][:D_LONG, :]), e_w1b=bf(emb["w1"][D_LONG:, :]),
        e_b1=emb["b1"], e_g=emb["ln_g"], e_beta=emb["ln_b"],
        e_w2=bf(emb["w2"]), e_b2=emb["b2"],
        wqkv=bf(stack(lambda lp: jnp.concatenate(
            [lp["wq"] * scale, lp["wk"], lp["wv"]], axis=1))),
        bqkv=stack(lambda lp: jnp.concatenate(
            [lp["bq"] * scale, lp["bk"], lp["bv"]], axis=1)),
        wo=bf(stack(lambda lp: lp["wo"])), bo=stack(lambda lp: lp["bo"]),
        ln1_g=stack(lambda lp: lp["ln1_g"]), ln1_b=stack(lambda lp: lp["ln1_b"]),
        wf1=bf(stack(lambda lp: lp["wf1"])), bf1=stack(lambda lp: lp["bf1"]),
        wf2=bf(stack(lambda lp: lp["wf2"])), bf2=stack(lambda lp: lp["bf2"]),
        ln2_g=stack(lambda lp: lp["ln2_g"]), ln2_b=stack(lambda lp: lp["ln2_b"]),
    )


# ---- deterministic parameter init ---------------------------------------------
def init_params(key):
    def lin(k, din, dout, scale=0.05):
        kw, kb = jax.random.split(k)
        return (scale * jax.random.normal(kw, (din, dout), jnp.float32),
                scale * jax.random.normal(kb, (1, dout), jnp.float32))

    keys = jax.random.split(key, 2 + NUM_LAYERS)
    w1, b1 = lin(keys[0], D_LONG + D_BASE, D_MODEL)
    w2, b2 = lin(keys[1], D_MODEL, D_MODEL)
    embed = dict(w1=w1, b1=b1,
                 ln_g=jnp.ones((1, D_MODEL), jnp.float32),
                 ln_b=jnp.zeros((1, D_MODEL), jnp.float32),
                 w2=w2, b2=b2)
    layers = []
    for l in range(NUM_LAYERS):
        ks = jax.random.split(keys[2 + l], 6)
        wq, bq = lin(ks[0], D_MODEL, D_MODEL)
        wk, bk = lin(ks[1], D_MODEL, D_MODEL)
        wv, bv = lin(ks[2], D_MODEL, D_MODEL)
        wo, bo = lin(ks[3], D_MODEL, D_MODEL)
        wf1, bf1 = lin(ks[4], D_MODEL, D_FF)
        wf2, bf2 = lin(ks[5], D_FF, D_MODEL)
        layers.append(dict(
            wq=wq, bq=bq, wk=wk, bk=bk, wv=wv, bv=bv, wo=wo, bo=bo,
            ln1_g=jnp.ones((1, D_MODEL), jnp.float32),
            ln1_b=jnp.zeros((1, D_MODEL), jnp.float32),
            wf1=wf1, bf1=bf1, wf2=wf2, bf2=bf2,
            ln2_g=jnp.ones((1, D_MODEL), jnp.float32),
            ln2_b=jnp.zeros((1, D_MODEL), jnp.float32)))
    return dict(embed=embed, layers=layers)


if __name__ == "__main__":
    key = jax.random.PRNGKey(0)
    kl, kb, kp = jax.random.split(key, 3)
    long = jax.random.normal(kl, (B, S, D_LONG), jnp.float32)
    base = jax.random.normal(kb, (B, S, D_BASE), jnp.float32)
    obs_time = jnp.tile(jnp.arange(S, dtype=jnp.float32)[None, :], (B, 1)) * 0.5
    mask = jnp.tile(jnp.tril(jnp.ones((S, S), jnp.float32))[None], (B, 1, 1))

    params = init_params(kp)
    packed = pack_params(params)

    out = decoder_forward(long, base, mask, obs_time, packed)
    out = jax.block_until_ready(out)

    assert out.shape == (B, S, D_MODEL), out.shape
    assert bool(jnp.all(jnp.isfinite(out)))
    print("KERNEL_OK")
</pallas_src>

<mosaic_0001>
module attributes {stable_mosaic.version = 11 : i64} {
  func.func @decoder_fused_kernel(%arg0: memref<16x3xbf16, #tpu.memory_space<vmem>>, %arg1: memref<16x2xbf16, #tpu.memory_space<vmem>>, %arg2: memref<16x32xf32, #tpu.memory_space<vmem>>, %arg3: memref<16x8xf32, #tpu.memory_space<vmem>>, %arg4: memref<3x32xbf16, #tpu.memory_space<vmem>>, %arg5: memref<2x32xbf16, #tpu.memory_space<vmem>>, %arg6: memref<1x32xf32, #tpu.memory_space<vmem>>, %arg7: memref<1x32xf32, #tpu.memory_space<vmem>>, %arg8: memref<1x32xf32, #tpu.memory_space<vmem>>, %arg9: memref<32x32xbf16, #tpu.memory_space<vmem>>, %arg10: memref<1x32xf32, #tpu.memory_space<vmem>>, %arg11: memref<2x32x96xbf16, #tpu.memory_space<vmem>>, %arg12: memref<2x1x96xf32, #tpu.memory_space<vmem>>, %arg13: memref<2x32x32xbf16, #tpu.memory_space<vmem>>, %arg14: memref<2x1x32xf32, #tpu.memory_space<vmem>>, %arg15: memref<2x1x32xf32, #tpu.memory_space<vmem>>, %arg16: memref<2x1x32xf32, #tpu.memory_space<vmem>>, %arg17: memref<2x32x64xbf16, #tpu.memory_space<vmem>>, %arg18: memref<2x1x64xf32, #tpu.memory_space<vmem>>, %arg19: memref<2x64x32xbf16, #tpu.memory_space<vmem>>, %arg20: memref<2x1x32xf32, #tpu.memory_space<vmem>>, %arg21: memref<2x1x32xf32, #tpu.memory_space<vmem>>, %arg22: memref<2x1x32xf32, #tpu.memory_space<vmem>>, %arg23: memref<16x32xf32, #tpu.memory_space<vmem>>, %arg24: memref<16x32xf32, #tpu.memory_space<vmem>>) attributes {dimension_semantics = [], scalar_prefetch = 0 : i64, scratch_operands = 1 : i64, tpu.core_type = #tpu.core_type<tc>} {
    %0 = tpu.iota {dimensions = array<i32: 0>} : vector<16x16xi32>
    %1 = tpu.iota {dimensions = array<i32: 1>} : vector<16x16xi32>
    %c3_i32 = arith.constant 3 : i32
    %2 = vector.broadcast %c3_i32 : i32 to vector<16x16xi32>
    %3 = arith.shrsi %0, %2 : vector<16x16xi32>
    %c3_i32_0 = arith.constant 3 : i32
    %4 = vector.broadcast %c3_i32_0 : i32 to vector<16x16xi32>
    %5 = arith.shrsi %1, %4 : vector<16x16xi32>
    %6 = arith.cmpi eq, %3, %5 : vector<16x16xi32>
    %c0 = arith.constant 0 : index
    %c0_1 = arith.constant 0 : index
    %7 = vector.load %arg3[%c0, %c0_1] : memref<16x8xf32, #tpu.memory_space<vmem>>, vector<16x8xf32>
    %8 = tpu.concatenate %7, %7 in 1 : vector<16x8xf32>, vector<16x8xf32> -> vector<16x16xf32>
    %cst = arith.constant 0.000000e+00 : f32
    %9 = vector.broadcast %cst : f32 to vector<16x16xf32>
    %10 = arith.cmpf ogt, %8, %9 : vector<16x16xf32>
    %11 = arith.andi %10, %6 : vector<16x16xi1>
    %cst_2 = arith.constant 0.000000e+00 : f32
    %cst_3 = arith.constant -1.000000e+09 : f32
    %12 = vector.broadcast %cst_2 : f32 to vector<16x16xf32>
    %13 = vector.broadcast %cst_3 : f32 to vector<16x16xf32>
    %14 = arith.select %11, %12, %13 : vector<16x16xi1>, vector<16x16xf32>
    %c0_4 = arith.constant 0 : index
    %c0_5 = arith.constant 0 : index
    %15 = vector.load %arg0[%c0_4, %c0_5] : memref<16x3xbf16, #tpu.memory_space<vmem>>, vector<16x3xbf16>
    %c0_6 = arith.constant 0 : index
    %c0_7 = arith.constant 0 : index
    %16 = vector.load %arg4[%c0_6, %c0_7] : memref<3x32xbf16, #tpu.memory_space<vmem>>, vector<3x32xbf16>
    %cst_8 = arith.constant dense<0.000000e+00> : vector<16x32xf32>
    %17 = tpu.matmul %15, %16, %cst_8 {dimension_numbers = #tpu.dot_dimension_numbers<[1], [0], [0], [1], [0, 0, 1, 1], [], []>} : vector<16x3xbf16>, vector<3x32xbf16>, vector<16x32xf32> -> vector<16x32xf32>
    %c0_9 = arith.constant 0 : index
    %c0_10 = arith.constant 0 : index
    %18 = vector.load %arg1[%c0_9, %c0_10] : memref<16x2xbf16, #tpu.memory_space<vmem>>, vector<16x2xbf16>
    %c0_11 = arith.constant 0 : index
    %c0_12 = arith.constant 0 : index
    %19 = vector.load %arg5[%c0_11, %c0_12] : memref<2x32xbf16, #tpu.memory_space<vmem>>, vector<2x32xbf16>
    %cst_13 = arith.constant dense<0.000000e+00> : vector<16x32xf32>
    %20 = tpu.matmul %18, %19, %cst_13 {dimension_numbers = #tpu.dot_dimension_numbers<[1], [0], [0], [1], [0, 0, 1, 1], [], []>} : vector<16x2xbf16>, vector<2x32xbf16>, vector<16x32xf32> -> vector<16x32xf32>
    %21 = arith.addf %17, %20 : vector<16x32xf32>
    %c0_14 = arith.constant 0 : index
    %c0_15 = arith.constant 0 : index
    %22 = vector.load %arg6[%c0_14, %c0_15] : memref<1x32xf32, #tpu.memory_space<vmem>>, vector<1x32xf32>
    %23 = vector.broadcast %22 : vector<1x32xf32> to vector<16x32xf32>
    %24 = arith.addf %21, %23 : vector<16x32xf32>
    %cst_16 = arith.constant 0.000000e+00 : f32
    %25 = vector.broadcast %cst_16 : f32 to vector<16x32xf32>
    %26 = arith.maximumf %24, %25 : vector<16x32xf32>
    %c0_17 = arith.constant 0 : index
    %c0_18 = arith.constant 0 : index
    %27 = vector.load %arg7[%c0_17, %c0_18] : memref<1x32xf32, #tpu.memory_space<vmem>>, vector<1x32xf32>
    %c0_19 = arith.constant 0 : index
    %c0_20 = arith.constant 0 : index
    %28 = vector.load %arg8[%c0_19, %c0_20] : memref<1x32xf32, #tpu.memory_space<vmem>>, vector<1x32xf32>
    %cst_21 = arith.constant dense<0.000000e+00> : vector<16xf32>
    %29 = vector.multi_reduction <add>, %26, %cst_21 [1] : vector<16x32xf32> to vector<16xf32>
    %30 = vector.shape_cast %29 : vector<16xf32> to vector<16x1xf32>
    %cst_22 = arith.constant 3.200000e+01 : f32
    %31 = vector.broadcast %cst_22 : f32 to vector<16x1xf32>
    %32 = arith.divf %30, %31 : vector<16x1xf32>
    %33 = vector.broadcast %32 : vector<16x1xf32> to vector<16x32xf32>
    %34 = arith.subf %26, %33 : vector<16x32xf32>
    %35 = arith.mulf %34, %34 : vector<16x32xf32>
    %cst_23 = arith.constant dense<0.000000e+00> : vector<16xf32>
    %36 = vector.multi_reduction <add>, %35, %cst_23 [1] : vector<16x32xf32> to vector<16xf32>
    %37 = vector.shape_cast %36 : vector<16xf32> to vector<16x1xf32>
    %cst_24 = arith.constant 3.200000e+01 : f32
    %38 = vector.broadcast %cst_24 : f32 to vector<16x1xf32>
    %39 = arith.divf %37, %38 : vector<16x1xf32>
    %40 = vector.broadcast %32 : vector<16x1xf32> to vector<16x32xf32>
    %41 = arith.subf %26, %40 : vector<16x32xf32>
    %cst_25 = arith.constant 9.99999974E-6 : f32
    %42 = vector.broadcast %cst_25 : f32 to vector<16x1xf32>
    %43 = arith.addf %39, %42 : vector<16x1xf32>
    %44 = math.rsqrt %43 : vector<16x1xf32>
    %45 = vector.broadcast %44 : vector<16x1xf32> to vector<16x32xf32>
    %46 = arith.mulf %41, %45 : vector<16x32xf32>
    %47 = vector.broadcast %27 : vector<1x32xf32> to vector<16x32xf32>
    %48 = arith.mulf %46, %47 : vector<16x32xf32>
    %49 = vector.broadcast %28 : vector<1x32xf32> to vector<16x32xf32>
    %50 = arith.addf %48, %49 : vector<16x32xf32>
    %51 = arith.truncf %50 : vector<16x32xf32> to vector<16x32xbf16>
    %c0_26 = arith.constant 0 : index
    %c0_27 = arith.constant 0 : index
    %52 = vector.load %arg9[%c0_26, %c0_27] : memref<32x32xbf16, #tpu.memory_space<vmem>>, vector<32x32xbf16>
    %cst_28 = arith.constant dense<0.000000e+00> : vector<16x32xf32>
    %53 = tpu.matmul %51, %52, %cst_28 {dimension_numbers = #tpu.dot_dimension_numbers<[1], [0], [0], [1], [0, 0, 1, 1], [], []>} : vector<16x32xbf16>, vector<32x32xbf16>, vector<16x32xf32> -> vector<16x32xf32>
    %c0_29 = arith.constant 0 : index
    %c0_30 = arith.constant 0 : index
    %54 = vector.load %arg10[%c0_29, %c0_30] : memref<1x32xf32, #tpu.memory_space<vmem>>, vector<1x32xf32>
    %55 = vector.broadcast %54 : vector<1x32xf32> to vector<16x32xf32>
    %56 = arith.addf %53, %55 : vector<16x32xf32>
    %c0_31 = arith.constant 0 : index
    %c0_32 = arith.constant 0 : index
    %57 = vector.load %arg2[%c0_31, %c0_32] : memref<16x32xf32, #tpu.memory_space<vmem>>, vector<16x32xf32>
    %58 = arith.addf %56, %57 : vector<16x32xf32>
    %59 = arith.truncf %58 : vector<16x32xf32> to vector<16x32xbf16>
    %c0_33 = arith.constant 0 : index
    %c0_34 = arith.constant 0 : index
    %c0_35 = arith.constant 0 : index
    %60 = vector.load %arg11[%c0_33, %c0_34, %c0_35] : memref<2x32x96xbf16, #tpu.memory_space<vmem>>, vector<1x32x96xbf16>
    %61 = vector.shape_cast %60 : vector<1x32x96xbf16> to vector<32x96xbf16>
    %cst_36 = arith.constant dense<0.000000e+00> : vector<16x96xf32>
    %62 = tpu.matmul %59, %61, %cst_36 {dimension_numbers = #tpu.dot_dimension_numbers<[1], [0], [0], [1], [0, 0, 1, 1], [], []>} : vector<16x32xbf16>, vector<32x96xbf16>, vector<16x96xf32> -> vector<16x96xf32>
    %c0_37 = arith.constant 0 : index
    %c0_38 = arith.constant 0 : index
    %c0_39 = arith.constant 0 : index
    %63 = vector.load %arg12[%c0_37, %c0_38, %c0_39] : memref<2x1x96xf32, #tpu.memory_space<vmem>>, vector<1x1x96xf32>
    %64 = vector.shape_cast %63 : vector<1x1x96xf32> to vector<1x96xf32>
    %65 = vector.broadcast %64 : vector<1x96xf32> to vector<16x96xf32>
    %66 = arith.addf %62, %65 : vector<16x96xf32>
    %67 = vector.extract_strided_slice %66 {offsets = [0, 0], sizes = [16, 32], strides = [1, 1]} : vector<16x96xf32> to vector<16x32xf32>
    %68 = arith.truncf %67 : vector<16x32xf32> to vector<16x32xbf16>
    %69 = vector.extract_strided_slice %66 {offsets = [0, 32], sizes = [16, 32], strides = [1, 1]} : vector<16x96xf32> to vector<16x32xf32>
    %70 = arith.truncf %69 : vector<16x32xf32> to vector<16x32xbf16>
    %71 = vector.extract_strided_slice %66 {offsets = [0, 64], sizes = [16, 32], strides = [1, 1]} : vector<16x96xf32> to vector<16x32xf32>
    %72 = arith.truncf %71 : vector<16x32xf32> to vector<16x32xbf16>
    %73 = vector.extract_strided_slice %68 {offsets = [0, 0], sizes = [16, 8], strides = [1, 1]} : vector<16x32xbf16> to vector<16x8xbf16>
    %74 = vector.extract_strided_slice %70 {offsets = [0, 0], sizes = [16, 8], strides = [1, 1]} : vector<16x32xbf16> to vector<16x8xbf16>
    %cst_40 = arith.constant dense<0.000000e+00> : vector<16x16xf32>
    %75 = tpu.matmul %73, %74, %cst_40 {dimension_numbers = #tpu.dot_dimension_numbers<[1], [1], [0], [0], [0, 0, 1, 0], [], []>} : vector<16x8xbf16>, vector<16x8xbf16>, vector<16x16xf32> -> vector<16x16xf32>
    %76 = arith.addf %75, %14 : vector<16x16xf32>
    %cst_41 = arith.constant dense<0xFF800000> : vector<16xf32>
    %77 = vector.multi_reduction <maximumf>, %76, %cst_41 [1] : vector<16x16xf32> to vector<16xf32>
    %78 = vector.shape_cast %77 : vector<16xf32> to vector<16x1xf32>
    %79 = vector.broadcast %78 : vector<16x1xf32> to vector<16x16xf32>
    %80 = arith.subf %76, %79 : vector<16x16xf32>
    %81 = math.exp %80 : vector<16x16xf32>
    %cst_42 = arith.constant dense<0.000000e+00> : vector<16xf32>
    %82 = vector.multi_reduction <add>, %81, %cst_42 [1] : vector<16x16xf32> to vector<16xf32>
    %83 = vector.shape_cast %82 : vector<16xf32> to vector<16x1xf32>
    %84 = tpu.reciprocal %83 {approx = true} : vector<16x1xf32> -> vector<16x1xf32>
    %85 = vector.broadcast %84 : vector<16x1xf32> to vector<16x16xf32>
    %86 = arith.mulf %81, %85 : vector<16x16xf32>
    %87 = arith.truncf %86 : vector<16x16xf32> to vector<16x16xbf16>
    %88 = vector.extract_strided_slice %72 {offsets = [0, 0], sizes = [16, 8], strides = [1, 1]} : vector<16x32xbf16> to vector<16x8xbf16>
    %cst_43 = arith.constant dense<0.000000e+00> : vector<16x8xf32>
    %89 = tpu.matmul %87, %88, %cst_43 {dimension_numbers = #tpu.dot_dimension_numbers<[1], [0], [0], [1], [0, 0, 1, 1], [], []>} : vector<16x16xbf16>, vector<16x8xbf16>, vector<16x8xf32> -> vector<16x8xf32>
    %c0_44 = arith.constant 0 : index
    %c0_45 = arith.constant 0 : index
    %90 = vector.load %arg24[%c0_44, %c0_45] : memref<16x32xf32, #tpu.memory_space<vmem>>, vector<16x8xf32>
    tpu.vector_store %arg24[%c0_44, %c0_45], %89 {strides = array<i32>} : memref<16x32xf32, #tpu.memory_space<vmem>>, vector<16x8xf32>,
    %91 = vector.extract_strided_slice %68 {offsets = [0, 8], sizes = [16, 8], strides = [1, 1]} : vector<16x32xbf16> to vector<16x8xbf16>
    %92 = vector.extract_strided_slice %70 {offsets = [0, 8], sizes = [16, 8], strides = [1, 1]} : vector<16x32xbf16> to vector<16x8xbf16>
    %cst_46 = arith.constant dense<0.000000e+00> : vector<16x16xf32>
    %93 = tpu.matmul %91, %92, %cst_46 {dimension_numbers = #tpu.dot_dimension_numbers<[1], [1], [0], [0], [0, 0, 1, 0], [], []>} : vector<16x8xbf16>, vector<16x8xbf16>, vector<16x16xf32> -> vector<16x16xf32>
    %94 = arith.addf %93, %14 : vector<16x16xf32>
    %cst_47 = arith.constant dense<0xFF800000> : vector<16xf32>
    %95 = vector.multi_reduction <maximumf>, %94, %cst_47 [1] : vector<16x16xf32> to vector<16xf32>
    %96 = vector.shape_cast %95 : vector<16xf32> to vector<16x1xf32>
    %97 = vector.broadcast %96 : vector<16x1xf32> to vector<16x16xf32>
    %98 = arith.subf %94, %97 : vector<16x16xf32>
    %99 = math.exp %98 : vector<16x16xf32>
    %cst_48 = arith.constant dense<0.000000e+00> : vector<16xf32>
    %100 = vector.multi_reduction <add>, %99, %cst_48 [1] : vector<16x16xf32> to vector<16xf32>
    %101 = vector.shape_cast %100 : vector<16xf32> to vector<16x1xf32>
    %102 = tpu.reciprocal %101 {approx = true} : vector<16x1xf32> -> vector<16x1xf32>
    %103 = vector.broadcast %102 : vector<16x1xf32> to vector<16x16xf32>
    %104 = arith.mulf %99, %103 : vector<16x16xf32>
    %105 = arith.truncf %104 : vector<16x16xf32> to vector<16x16xbf16>
    %106 = vector.extract_strided_slice %72 {offsets = [0, 8], sizes = [16, 8], strides = [1, 1]} : vector<16x32xbf16> to vector<16x8xbf16>
    %cst_49 = arith.constant dense<0.000000e+00> : vector<16x8xf32>
    %107 = tpu.matmul %105, %106, %cst_49 {dimension_numbers = #tpu.dot_dimension_numbers<[1], [0], [0], [1], [0, 0, 1, 1], [], []>} : vector<16x16xbf16>, vector<16x8xbf16>, vector<16x8xf32> -> vector<16x8xf32>
    %c0_50 = arith.constant 0 : index
    %c8 = arith.constant 8 : index
    %108 = vector.load %arg24[%c0_50, %c8] : memref<16x32xf32, #tpu.memory_space<vmem>>, vector<16x8xf32>
    tpu.vector_store %arg24[%c0_50, %c8], %107 {strides = array<i32>} : memref<16x32xf32, #tpu.memory_space<vmem>>, vector<16x8xf32>,
    %109 = vector.extract_strided_slice %68 {offsets = [0, 16], sizes = [16, 8], strides = [1, 1]} : vector<16x32xbf16> to vector<16x8xbf16>
    %110 = vector.extract_strided_slice %70 {offsets = [0, 16], sizes = [16, 8], strides = [1, 1]} : vector<16x32xbf16> to vector<16x8xbf16>
    %cst_51 = arith.constant dense<0.000000e+00> : vector<16x16xf32>
    %111 = tpu.matmul %109, %110, %cst_51 {dimension_numbers = #tpu.dot_dimension_numbers<[1], [1], [0], [0], [0, 0, 1, 0], [], []>} : vector<16x8xbf16>, vector<16x8xbf16>, vector<16x16xf32> -> vector<16x16xf32>
    %112 = arith.addf %111, %14 : vector<16x16xf32>
    %cst_52 = arith.constant dense<0xFF800000> : vector<16xf32>
    %113 = vector.multi_reduction <maximumf>, %112, %cst_52 [1] : vector<16x16xf32> to vector<16xf32>
    %114 = vector.shape_cast %113 : vector<16xf32> to vector<16x1xf32>
    %115 = vector.broadcast %114 : vector<16x1xf32> to vector<16x16xf32>
    %116 = arith.subf %112, %115 : vector<16x16xf32>
    %117 = math.exp %116 : vector<16x16xf32>
    %cst_53 = arith.constant dense<0.000000e+00> : vector<16xf32>
    %118 = vector.multi_reduction <add>, %117, %cst_53 [1] : vector<16x16xf32> to vector<16xf32>
    %119 = vector.shape_cast %118 : vector<16xf32> to vector<16x1xf32>
    %120 = tpu.reciprocal %119 {approx = true} : vector<16x1xf32> -> vector<16x1xf32>
    %121 = vector.broadcast %120 : vector<16x1xf32> to vector<16x16xf32>
    %122 = arith.mulf %117, %121 : vector<16x16xf32>
    %123 = arith.truncf %122 : vector<16x16xf32> to vector<16x16xbf16>
    %124 = vector.extract_strided_slice %72 {offsets = [0, 16], sizes = [16, 8], strides = [1, 1]} : vector<16x32xbf16> to vector<16x8xbf16>
    %cst_54 = arith.constant dense<0.000000e+00> : vector<16x8xf32>
    %125 = tpu.matmul %123, %124, %cst_54 {dimension_numbers = #tpu.dot_dimension_numbers<[1], [0], [0], [1], [0, 0, 1, 1], [], []>} : vector<16x16xbf16>, vector<16x8xbf16>, vector<16x8xf32> -> vector<16x8xf32>
    %c0_55 = arith.constant 0 : index
    %c16 = arith.constant 16 : index
    %126 = vector.load %arg24[%c0_55, %c16] : memref<16x32xf32, #tpu.memory_space<vmem>>, vector<16x8xf32>
    tpu.vector_store %arg24[%c0_55, %c16], %125 {strides = array<i32>} : memref<16x32xf32, #tpu.memory_space<vmem>>, vector<16x8xf32>,
    %127 = vector.extract_strided_slice %68 {offsets = [0, 24], sizes = [16, 8], strides = [1, 1]} : vector<16x32xbf16> to vector<16x8xbf16>
    %128 = vector.extract_strided_slice %70 {offsets = [0, 24], sizes = [16, 8], strides = [1, 1]} : vector<16x32xbf16> to vector<16x8xbf16>
    %cst_56 = arith.constant dense<0.000000e+00> : vector<16x16xf32>
    %129 = tpu.matmul %127, %128, %cst_56 {dimension_numbers = #tpu.dot_dimension_numbers<[1], [1], [0], [0], [0, 0, 1, 0], [], []>} : vector<16x8xbf16>, vector<16x8xbf16>, vector<16x16xf32> -> vector<16x16xf32>
    %130 = arith.addf %129, %14 : vector<16x16xf32>
    %cst_57 = arith.constant dense<0xFF800000> : vector<16xf32>
    %131 = vector.multi_reduction <maximumf>, %130, %cst_57 [1] : vector<16x16xf32> to vector<16xf32>
    %132 = vector.shape_cast %131 : vector<16xf32> to vector<16x1xf32>
    %133 = vector.broadcast %132 : vector<16x1xf32> to vector<16x16xf32>
    %134 = arith.subf %130, %133 : vector<16x16xf32>
    %135 = math.exp %134 : vector<16x16xf32>
    %cst_58 = arith.constant dense<0.000000e+00> : vector<16xf32>
    %136 = vector.multi_reduction <add>, %135, %cst_58 [1] : vector<16x16xf32> to vector<16xf32>
    %137 = vector.shape_cast %136 : vector<16xf32> to vector<16x1xf32>
    %138 = tpu.reciprocal %137 {approx = true} : vector<16x1xf32> -> vector<16x1xf32>
    %139 = vector.broadcast %138 : vector<16x1xf32> to vector<16x16xf32>
    %140 = arith.mulf %135, %139 : vector<16x16xf32>
    %141 = arith.truncf %140 : vector<16x16xf32> to vector<16x16xbf16>
    %142 = vector.extract_strided_slice %72 {offsets = [0, 24], sizes = [16, 8], strides = [1, 1]} : vector<16x32xbf16> to vector<16x8xbf16>
    %cst_59 = arith.constant dense<0.000000e+00> : vector<16x8xf32>
    %143 = tpu.matmul %141, %142, %cst_59 {dimension_numbers = #tpu.dot_dimension_numbers<[1], [0], [0], [1], [0, 0, 1, 1], [], []>} : vector<16x16xbf16>, vector<16x8xbf16>, vector<16x8xf32> -> vector<16x8xf32>
    %c0_60 = arith.constant 0 : index
    %c24 = arith.constant 24 : index
    %144 = vector.load %arg24[%c0_60, %c24] : memref<16x32xf32, #tpu.memory_space<vmem>>, vector<16x8xf32>
    tpu.vector_store %arg24[%c0_60, %c24], %143 {strides = array<i32>} : memref<16x32xf32, #tpu.memory_space<vmem>>, vector<16x8xf32>,
    %c1 = arith.constant 1 : index
    %c0_61 = arith.constant 0 : index
    %c0_62 = arith.constant 0 : index
    %145 = vector.load %arg11[%c1, %c0_61, %c0_62] : memref<2x32x96xbf16, #tpu.memory_space<vmem>>, vector<1x32x96xbf16>
    %146 = vector.shape_cast %145 : vector<1x32x96xbf16> to vector<32x96xbf16>
    %cst_63 = arith.constant dense<0.000000e+00> : vector<16x96xf32>
    %147 = tpu.matmul %59, %146, %cst_63 {dimension_numbers = #tpu.dot_dimension_numbers<[1], [0], [0], [1], [0, 0, 1, 1], [], []>} : vector<16x32xbf16>, vector<32x96xbf16>, vector<16x96xf32> -> vector<16x96xf32>
    %c1_64 = arith.constant 1 : index
    %c0_65 = arith.constant 0 : index
    %c0_66 = arith.constant 0 : index
    %148 = vector.load %arg12[%c1_64, %c0_65, %c0_66] : memref<2x1x96xf32, #tpu.memory_space<vmem>>, vector<1x1x96xf32>
    %149 = vector.shape_cast %148 : vector<1x1x96xf32> to vector<1x96xf32>
    %150 = vector.broadcast %149 : vector<1x96xf32> to vector<16x96xf32>
    %151 = arith.addf %147, %150 : vector<16x96xf32>
    %152 = vector.extract_strided_slice %151 {offsets = [0, 0], sizes = [16, 32], strides = [1, 1]} : vector<16x96xf32> to vector<16x32xf32>
    %153 = arith.truncf %152 : vector<16x32xf32> to vector<16x32xbf16>
    %154 = vector.extract_strided_slice %151 {offsets = [0, 32], sizes = [16, 32], strides = [1, 1]} : vector<16x96xf32> to vector<16x32xf32>
    %155 = arith.truncf %154 : vector<16x32xf32> to vector<16x32xbf16>
    %156 = vector.extract_strided_slice %151 {offsets = [0, 64], sizes = [16, 32], strides = [1, 1]} : vector<16x96xf32> to vector<16x32xf32>
    %157 = arith.truncf %156 : vector<16x32xf32> to vector<16x32xbf16>
    %158 = vector.extract_strided_slice %153 {offsets = [0, 0], sizes = [16, 8], strides = [1, 1]} : vector<16x32xbf16> to vector<16x8xbf16>
    %159 = vector.extract_strided_slice %155 {offsets = [0, 0], sizes = [16, 8], strides = [1, 1]} : vector<16x32xbf16> to vector<16x8xbf16>
    %cst_67 = arith.constant dense<0.000000e+00> : vector<16x16xf32>
    %160 = tpu.matmul %158, %159, %cst_67 {dimension_numbers = #tpu.dot_dimension_numbers<[1], [1], [0], [0], [0, 0, 1, 0], [], []>} : vector<16x8xbf16>, vector<16x8xbf16>, vector<16x16xf32> -> vector<16x16xf32>
    %161 = arith.addf %160, %14 : vector<16x16xf32>
    %cst_68 = arith.constant dense<0xFF800000> : vector<16xf32>
    %162 = vector.multi_reduction <maximumf>, %161, %cst_68 [1] : vector<16x16xf32> to vector<16xf32>
    %163 = vector.shape_cast %162 : vector<16xf32> to vector<16x1xf32>
    %164 = vector.broadcast %163 : vector<16x1xf32> to vector<16x16xf32>
    %165 = arith.subf %161, %164 : vector<16x16xf32>
    %166 = math.exp %165 : vector<16x16xf32>
    %cst_69 = arith.constant dense<0.000000e+00> : vector<16xf32>
    %167 = vector.multi_reduction <add>, %166, %cst_69 [1] : vector<16x16xf32> to vector<16xf32>
    %168 = vector.shape_cast %167 : vector<16xf32> to vector<16x1xf32>
    %169 = tpu.reciprocal %168 {approx = true} : vector<16x1xf32> -> vector<16x1xf32>
    %170 = vector.broadcast %169 : vector<16x1xf32> to vector<16x16xf32>
    %171 = arith.mulf %166, %170 : vector<16x16xf32>
    %172 = arith.truncf %171 : vector<16x16xf32> to vector<16x16xbf16>
    %173 = vector.extract_strided_slice %157 {offsets = [0, 0], sizes = [16, 8], strides = [1, 1]} : vector<16x32xbf16> to vector<16x8xbf16>
    %cst_70 = arith.constant dense<0.000000e+00> : vector<16x8xf32>
    %174 = tpu.matmul %172, %173, %cst_70 {dimension_numbers = #tpu.dot_dimension_numbers<[1], [0], [0], [1], [0, 0, 1, 1], [], []>} : vector<16x16xbf16>, vector<16x8xbf16>, vector<16x8xf32> -> vector<16x8xf32>
    %c0_71 = arith.constant 0 : index
    %c0_72 = arith.constant 0 : index
    %175 = vector.load %arg24[%c0_71, %c0_72] : memref<16x32xf32, #tpu.memory_space<vmem>>, vector<16x8xf32>
    tpu.vector_store %arg24[%c0_71, %c0_72], %174 {strides = array<i32>} : memref<16x32xf32, #tpu.memory_space<vmem>>, vector<16x8xf32>,
    %176 = vector.extract_strided_slice %153 {offsets = [0, 8], sizes = [16, 8], strides = [1, 1]} : vector<16x32xbf16> to vector<16x8xbf16>
    %177 = vector.extract_strided_slice %155 {offsets = [0, 8], sizes = [16, 8], strides = [1, 1]} : vector<16x32xbf16> to vector<16x8xbf16>
    %cst_73 = arith.constant dense<0.000000e+00> : vector<16x16xf32>
    %178 = tpu.matmul %176, %177, %cst_73 {dimension_numbers = #tpu.dot_dimension_numbers<[1], [1], [0], [0], [0, 0, 1, 0], [], []>} : vector<16x8xbf16>, vector<16x8xbf16>, vector<16x16xf32> -> vector<16x16xf32>
    %179 = arith.addf %178, %14 : vector<16x16xf32>
    %cst_74 = arith.constant dense<0xFF800000> : vector<16xf32>
    %180 = vector.multi_reduction <maximumf>, %179, %cst_74 [1] : vector<16x16xf32> to vector<16xf32>
    %181 = vector.shape_cast %180 : vector<16xf32> to vector<16x1xf32>
    %182 = vector.broadcast %181 : vector<16x1xf32> to vector<16x16xf32>
    %183 = arith.subf %179, %182 : vector<16x16xf32>
    %184 = math.exp %183 : vector<16x16xf32>
    %cst_75 = arith.constant dense<0.000000e+00> : vector<16xf32>
    %185 = vector.multi_reduction <add>, %184, %cst_75 [1] : vector<16x16xf32> to vector<16xf32>
    %186 = vector.shape_cast %185 : vector<16xf32> to vector<16x1xf32>
    %187 = tpu.reciprocal %186 {approx = true} : vector<16x1xf32> -> vector<16x1xf32>
    %188 = vector.broadcast %187 : vector<16x1xf32> to vector<16x16xf32>
    %189 = arith.mulf %184, %188 : vector<16x16xf32>
    %190 = arith.truncf %189 : vector<16x16xf32> to vector<16x16xbf16>
    %191 = vector.extract_strided_slice %157 {offsets = [0, 8], sizes = [16, 8], strides = [1, 1]} : vector<16x32xbf16> to vector<16x8xbf16>
    %cst_76 = arith.constant dense<0.000000e+00> : vector<16x8xf32>
    %192 = tpu.matmul %190, %191, %cst_76 {dimension_numbers = #tpu.dot_dimension_numbers<[1], [0], [0], [1], [0, 0, 1, 1], [], []>} : vector<16x16xbf16>, vector<16x8xbf16>, vector<16x8xf32> -> vector<16x8xf32>
    %c0_77 = arith.constant 0 : index
    %c8_78 = arith.constant 8 : index
    %193 = vector.load %arg24[%c0_77, %c8_78] : memref<16x32xf32, #tpu.memory_space<vmem>>, vector<16x8xf32>
    tpu.vector_store %arg24[%c0_77, %c8_78], %192 {strides = array<i32>} : memref<16x32xf32, #tpu.memory_space<vmem>>, vector<16x8xf32>,
    %194 = vector.extract_strided_slice %153 {offsets = [0, 16], sizes = [16, 8], strides = [1, 1]} : vector<16x32xbf16> to vector<16x8xbf16>
    %195 = vector.extract_strided_slice %155 {offsets = [0, 16], sizes = [16, 8], strides = [1, 1]} : vector<16x32xbf16> to vector<16x8xbf16>
    %cst_79 = arith.constant dense<0.000000e+00> : vector<16x16xf32>
    %196 = tpu.matmul %194, %195, %cst_79 {dimension_numbers = #tpu.dot_dimension_numbers<[1], [1], [0], [0], [0, 0, 1, 0], [], []>} : vector<16x8xbf16>, vector<16x8xbf16>, vector<16x16xf32> -> vector<16x16xf32>
    %197 = arith.addf %196, %14 : vector<16x16xf32>
    %cst_80 = arith.constant dense<0xFF800000> : vector<16xf32>
    %198 = vector.multi_reduction <maximumf>, %197, %cst_80 [1] : vector<16x16xf32> to vector<16xf32>
    %199 = vector.shape_cast %198 : vector<16xf32> to vector<16x1xf32>
    %200 = vector.broadcast %199 : vector<16x1xf32> to vector<16x16xf32>
    %201 = arith.subf %197, %200 : vector<16x16xf32>
    %202 = math.exp %201 : vector<16x16xf32>
    %cst_81 = arith.constant dense<0.000000e+00> : vector<16xf32>
    %203 = vector.multi_reduction <add>, %202, %cst_81 [1] : vector<16x16xf32> to vector<16xf32>
    %204 = vector.shape_cast %203 : vector<16xf32> to vector<16x1xf32>
    %205 = tpu.reciprocal %204 {approx = true} : vector<16x1xf32> -> vector<16x1xf32>
    %206 = vector.broadcast %205 : vector<16x1xf32> to vector<16x16xf32>
    %207 = arith.mulf %202, %206 : vector<16x16xf32>
    %208 = arith.truncf %207 : vector<16x16xf32> to vector<16x16xbf16>
    %209 = vector.extract_strided_slice %157 {offsets = [0, 16], sizes = [16, 8], strides = [1, 1]} : vector<16x32xbf16> to vector<16x8xbf16>
    %cst_82 = arith.constant dense<0.000000e+00> : vector<16x8xf32>
    %210 = tpu.matmul %208, %209, %cst_82 {dimension_numbers = #tpu.dot_dimension_numbers<[1], [0], [0], [1], [0, 0, 1, 1], [], []>} : vector<16x16xbf16>, vector<16x8xbf16>, vector<16x8xf32> -> vector<16x8xf32>
    %c0_83 = arith.constant 0 : index
    %c16_84 = arith.constant 16 : index
    %211 = vector.load %arg24[%c0_83, %c16_84] : memref<16x32xf32, #tpu.memory_space<vmem>>, vector<16x8xf32>
    tpu.vector_store %arg24[%c0_83, %c16_84], %210 {strides = array<i32>} : memref<16x32xf32, #tpu.memory_space<vmem>>, vector<16x8xf32>,
    %212 = vector.extract_strided_slice %153 {offsets = [0, 24], sizes = [16, 8], strides = [1, 1]} : vector<16x32xbf16> to vector<16x8xbf16>
    %213 = vector.extract_strided_slice %155 {offsets = [0, 24], sizes = [16, 8], strides = [1, 1]} : vector<16x32xbf16> to vector<16x8xbf16>
    %cst_85 = arith.constant dense<0.000000e+00> : vector<16x16xf32>
    %214 = tpu.matmul %212, %213, %cst_85 {dimension_numbers = #tpu.dot_dimension_numbers<[1], [1], [0], [0], [0, 0, 1, 0], [], []>} : vector<16x8xbf16>, vector<16x8xbf16>, vector<16x16xf32> -> vector<16x16xf32>
    %215 = arith.addf %214, %14 : vector<16x16xf32>
    %cst_86 = arith.constant dense<0xFF800000> : vector<16xf32>
    %216 = vector.multi_reduction <maximumf>, %215, %cst_86 [1] : vector<16x16xf32> to vector<16xf32>
    %217 = vector.shape_cast %216 : vector<16xf32> to vector<16x1xf32>
    %218 = vector.broadcast %217 : vector<16x1xf32> to vector<16x16xf32>
    %219 = arith.subf %215, %218 : vector<16x16xf32>
    %220 = math.exp %219 : vector<16x16xf32>
    %cst_87 = arith.constant dense<0.000000e+00> : vector<16xf32>
    %221 = vector.multi_reduction <add>, %220, %cst_87 [1] : vector<16x16xf32> to vector<16xf32>
    %222 = vector.shape_cast %221 : vector<16xf32> to vector<16x1xf32>
    %223 = tpu.reciprocal %222 {approx = true} : vector<16x1xf32> -> vector<16x1xf32>
    %224 = vector.broadcast %223 : vector<16x1xf32> to vector<16x16xf32>
    %225 = arith.mulf %220, %224 : vector<16x16xf32>
    %226 = arith.truncf %225 : vector<16x16xf32> to vector<16x16xbf16>
    %227 = vector.extract_strided_slice %157 {offsets = [0, 24], sizes = [16, 8], strides = [1, 1]} : vector<16x32xbf16> to vector<16x8xbf16>
    %cst_88 = arith.constant dense<0.000000e+00> : vector<16x8xf32>
    %228 = tpu.matmul %226, %227, %cst_88 {dimension_numbers = #tpu.dot_dimension_numbers<[1], [0], [0], [1], [0, 0, 1, 1], [], []>} : vector<16x16xbf16>, vector<16x8xbf16>, vector<16x8xf32> -> vector<16x8xf32>
    %c0_89 = arith.constant 0 : index
    %c24_90 = arith.constant 24 : index
    %229 = vector.load %arg24[%c0_89, %c24_90] : memref<16x32xf32, #tpu.memory_space<vmem>>, vector<16x8xf32>
    tpu.vector_store %arg24[%c0_89, %c24_90], %228 {strides = array<i32>} : memref<16x32xf32, #tpu.memory_space<vmem>>, vector<16x8xf32>,
    %c0_91 = arith.constant 0 : index
    %c0_92 = arith.constant 0 : index
    %230 = vector.load %arg24[%c0_91, %c0_92] : memref<16x32xf32, #tpu.memory_space<vmem>>, vector<16x32xf32>
    %231 = arith.truncf %230 : vector<16x32xf32> to vector<16x32xbf16>
    %c1_93 = arith.constant 1 : index
    %c0_94 = arith.constant 0 : index
    %c0_95 = arith.constant 0 : index
    %232 = vector.load %arg13[%c1_93, %c0_94, %c0_95] : memref<2x32x32xbf16, #tpu.memory_space<vmem>>, vector<1x32x32xbf16>
    %233 = vector.shape_cast %232 : vector<1x32x32xbf16> to vector<32x32xbf16>
    %cst_96 = arith.constant dense<0.000000e+00> : vector<16x32xf32>
    %234 = tpu.matmul %231, %233, %cst_96 {dimension_numbers = #tpu.dot_dimension_numbers<[1], [0], [0], [1], [0, 0, 1, 1], [], []>} : vector<16x32xbf16>, vector<32x32xbf16>, vector<16x32xf32> -> vector<16x32xf32>
    %c1_97 = arith.constant 1 : index
    %c0_98 = arith.constant 0 : index
    %c0_99 = arith.constant 0 : index
    %235 = vector.load %arg14[%c1_97, %c0_98, %c0_99] : memref<2x1x32xf32, #tpu.memory_space<vmem>>, vector<1x1x32xf32>
    %236 = vector.shape_cast %235 : vector<1x1x32xf32> to vector<1x32xf32>
    %237 = vector.broadcast %236 : vector<1x32xf32> to vector<16x32xf32>
    %238 = arith.addf %234, %237 : vector<16x32xf32>
    %239 = arith.addf %58, %238 : vector<16x32xf32>
    %c1_100 = arith.constant 1 : index
    %c0_101 = arith.constant 0 : index
    %c0_102 = arith.constant 0 : index
    %240 = vector.load %arg15[%c1_100, %c0_101, %c0_102] : memref<2x1x32xf32, #tpu.memory_space<vmem>>, vector<1x1x32xf32>
    %241 = vector.shape_cast %240 : vector<1x1x32xf32> to vector<1x32xf32>
    %c1_103 = arith.constant 1 : index
    %c0_104 = arith.constant 0 : index
    %c0_105 = arith.constant 0 : index
    %242 = vector.load %arg16[%c1_103, %c0_104, %c0_105] : memref<2x1x32xf32, #tpu.memory_space<vmem>>, vector<1x1x32xf32>
    %243 = vector.shape_cast %242 : vector<1x1x32xf32> to vector<1x32xf32>
    %cst_106 = arith.constant dense<0.000000e+00> : vector<16xf32>
    %244 = vector.multi_reduction <add>, %239, %cst_106 [1] : vector<16x32xf32> to vector<16xf32>
    %245 = vector.shape_cast %244 : vector<16xf32> to vector<16x1xf32>
    %cst_107 = arith.constant 3.200000e+01 : f32
    %246 = vector.broadcast %cst_107 : f32 to vector<16x1xf32>
    %247 = arith.divf %245, %246 : vector<16x1xf32>
    %248 = vector.broadcast %247 : vector<16x1xf32> to vector<16x32xf32>
    %249 = arith.subf %239, %248 : vector<16x32xf32>
    %250 = arith.mulf %249, %249 : vector<16x32xf32>
    %cst_108 = arith.constant dense<0.000000e+00> : vector<16xf32>
    %251 = vector.multi_reduction <add>, %250, %cst_108 [1] : vector<16x32xf32> to vector<16xf32>
    %252 = vector.shape_cast %251 : vector<16xf32> to vector<16x1xf32>
    %cst_109 = arith.constant 3.200000e+01 : f32
    %253 = vector.broadcast %cst_109 : f32 to vector<16x1xf32>
    %254 = arith.divf %252, %253 : vector<16x1xf32>
    %255 = vector.broadcast %247 : vector<16x1xf32> to vector<16x32xf32>
    %256 = arith.subf %239, %255 : vector<16x32xf32>
    %cst_110 = arith.constant 9.99999974E-6 : f32
    %257 = vector.broadcast %cst_110 : f32 to vector<16x1xf32>
    %258 = arith.addf %254, %257 : vector<16x1xf32>
    %259 = math.rsqrt %258 : vector<16x1xf32>
    %260 = vector.broadcast %259 : vector<16x1xf32> to vector<16x32xf32>
    %261 = arith.mulf %256, %260 : vector<16x32xf32>
    %262 = vector.broadcast %241 : vector<1x32xf32> to vector<16x32xf32>
    %263 = arith.mulf %261, %262 : vector<16x32xf32>
    %264 = vector.broadcast %243 : vector<1x32xf32> to vector<16x32xf32>
    %265 = arith.addf %263, %264 : vector<16x32xf32>
    %266 = arith.truncf %265 : vector<16x32xf32> to vector<16x32xbf16>
    %c1_111 = arith.constant 1 : index
    %c0_112 = arith.constant 0 : index
    %c0_113 = arith.constant 0 : index
    %267 = vector.load %arg17[%c1_111, %c0_112, %c0_113] : memref<2x32x64xbf16, #tpu.memory_space<vmem>>, vector<1x32x64xbf16>
    %268 = vector.shape_cast %267 : vector<1x32x64xbf16> to vector<32x64xbf16>
    %cst_114 = arith.constant dense<0.000000e+00> : vector<16x64xf32>
    %269 = tpu.matmul %266, %268, %cst_114 {dimension_numbers = #tpu.dot_dimension_numbers<[1], [0], [0], [1], [0, 0, 1, 1], [], []>} : vector<16x32xbf16>, vector<32x64xbf16>, vector<16x64xf32> -> vector<16x64xf32>
    %c1_115 = arith.constant 1 : index
    %c0_116 = arith.constant 0 : index
    %c0_117 = arith.constant 0 : index
    %270 = vector.load %arg18[%c1_115, %c0_116, %c0_117] : memref<2x1x64xf32, #tpu.memory_space<vmem>>, vector<1x1x64xf32>
    %271 = vector.shape_cast %270 : vector<1x1x64xf32> to vector<1x64xf32>
    %272 = vector.broadcast %271 : vector<1x64xf32> to vector<16x64xf32>
    %273 = arith.addf %269, %272 : vector<16x64xf32>
    %cst_118 = arith.constant 0.000000e+00 : f32
    %274 = vector.broadcast %cst_118 : f32 to vector<16x64xf32>
    %275 = arith.maximumf %273, %274 : vector<16x64xf32>
    %276 = arith.truncf %275 : vector<16x64xf32> to vector<16x64xbf16>
    %c1_119 = arith.constant 1 : index
    %c0_120 = arith.constant 0 : index
    %c0_121 = arith.constant 0 : index
    %277 = vector.load %arg19[%c1_119, %c0_120, %c0_121] : memref<2x64x32xbf16, #tpu.memory_space<vmem>>, vector<1x64x32xbf16>
    %278 = vector.shape_cast %277 : vector<1x64x32xbf16> to vector<64x32xbf16>
    %cst_122 = arith.constant dense<0.000000e+00> : vector<16x32xf32>
    %279 = tpu.matmul %276, %278, %cst_122 {dimension_numbers = #tpu.dot_dimension_numbers<[1], [0], [0], [1], [0, 0, 1, 1], [], []>} : vector<16x64xbf16>, vector<64x32xbf16>, vector<16x32xf32> -> vector<16x32xf32>
    %c1_123 = arith.constant 1 : index
    %c0_124 = arith.constant 0 : index
    %c0_125 = arith.constant 0 : index
    %280 = vector.load %arg20[%c1_123, %c0_124, %c0_125] : memref<2x1x32xf32, #tpu.memory_space<vmem>>, vector<1x1x32xf32>
    %281 = vector.shape_cast %280 : vector<1x1x32xf32> to vector<1x32xf32>
    %282 = vector.broadcast %281 : vector<1x32xf32> to vector<16x32xf32>
    %283 = arith.addf %279, %282 : vector<16x32xf32>
    %284 = arith.addf %265, %283 : vector<16x32xf32>
    %c1_126 = arith.constant 1 : index
    %c0_127 = arith.constant 0 : index
    %c0_128 = arith.constant 0 : index
    %285 = vector.load %arg21[%c1_126, %c0_127, %c0_128] : memref<2x1x32xf32, #tpu.memory_space<vmem>>, vector<1x1x32xf32>
    %286 = vector.shape_cast %285 : vector<1x1x32xf32> to vector<1x32xf32>
    %c1_129 = arith.constant 1 : index
    %c0_130 = arith.constant 0 : index
    %c0_131 = arith.constant 0 : index
    %287 = vector.load %arg22[%c1_129, %c0_130, %c0_131] : memref<2x1x32xf32, #tpu.memory_space<vmem>>, vector<1x1x32xf32>
    %288 = vector.shape_cast %287 : vector<1x1x32xf32> to vector<1x32xf32>
    %cst_132 = arith.constant dense<0.000000e+00> : vector<16xf32>
    %289 = vector.multi_reduction <add>, %284, %cst_132 [1] : vector<16x32xf32> to vector<16xf32>
    %290 = vector.shape_cast %289 : vector<16xf32> to vector<16x1xf32>
    %cst_133 = arith.constant 3.200000e+01 : f32
    %291 = vector.broadcast %cst_133 : f32 to vector<16x1xf32>
    %292 = arith.divf %290, %291 : vector<16x1xf32>
    %293 = vector.broadcast %292 : vector<16x1xf32> to vector<16x32xf32>
    %294 = arith.subf %284, %293 : vector<16x32xf32>
    %295 = arith.mulf %294, %294 : vector<16x32xf32>
    %cst_134 = arith.constant dense<0.000000e+00> : vector<16xf32>
    %296 = vector.multi_reduction <add>, %295, %cst_134 [1] : vector<16x32xf32> to vector<16xf32>
    %297 = vector.shape_cast %296 : vector<16xf32> to vector<16x1xf32>
    %cst_135 = arith.constant 3.200000e+01 : f32
    %298 = vector.broadcast %cst_135 : f32 to vector<16x1xf32>
    %299 = arith.divf %297, %298 : vector<16x1xf32>
    %300 = vector.broadcast %292 : vector<16x1xf32> to vector<16x32xf32>
    %301 = arith.subf %284, %300 : vector<16x32xf32>
    %cst_136 = arith.constant 9.99999974E-6 : f32
    %302 = vector.broadcast %cst_136 : f32 to vector<16x1xf32>
    %303 = arith.addf %299, %302 : vector<16x1xf32>
    %304 = math.rsqrt %303 : vector<16x1xf32>
    %305 = vector.broadcast %304 : vector<16x1xf32> to vector<16x32xf32>
    %306 = arith.mulf %301, %305 : vector<16x32xf32>
    %307 = vector.broadcast %286 : vector<1x32xf32> to vector<16x32xf32>
    %308 = arith.mulf %306, %307 : vector<16x32xf32>
    %309 = vector.broadcast %288 : vector<1x32xf32> to vector<16x32xf32>
    %310 = arith.addf %308, %309 : vector<16x32xf32>
    %c0_137 = arith.constant 0 : index
    %c0_138 = arith.constant 0 : index
    %311 = vector.load %arg23[%c0_137, %c0_138] : memref<16x32xf32, #tpu.memory_space<vmem>>, vector<16x32xf32>
    tpu.vector_store %arg23[%c0_137, %c0_138], %310 {strides = array<i32>} : memref<16x32xf32, #tpu.memory_space<vmem>>, vector<16x32xf32>,
    return
  }
}

</mosaic_0001>

<llo_original>
// kernel: decoder_forward.1
$region0: #{decoder_forward.1}
  #allocation0 [shape = 'u32[]', space=smem, size = 0x4, offset = 0x4, fixed_abs, tag = 'smem constant byte address 0x4 - core index']
  #allocation1 [shape = 'u32[144,128]{1,0:T(1,128)}', space=vmem, size = 0x12000, scoped, tag = 'internal scratch']
  #allocation2 [shape = 'f32[16,32]{1,0:T(8,128)}', space=vmem, size = 0x2000, scoped, tag = 'scratch operand']
  %s0 = inlined_call_operand.vmem [shape: bf16[16,3], index: 0, kind: input, shape index: {}]
  %s1 = inlined_call_operand.vmem [shape: bf16[16,2], index: 1, kind: input, shape index: {}]
  %s2 = inlined_call_operand.vmem [shape: f32[16,32], index: 2, kind: input, shape index: {}]
  %s3 = inlined_call_operand.vmem [shape: f32[16,8], index: 3, kind: input, shape index: {}]
  %s4 = inlined_call_operand.vmem [shape: bf16[3,32], index: 4, kind: input, shape index: {}]
  %s5 = inlined_call_operand.vmem [shape: bf16[2,32], index: 5, kind: input, shape index: {}]
  %s6 = inlined_call_operand.hbm [shape: f32[1,32], index: 6, kind: input, shape index: {}]
  %s7 = inlined_call_operand.vmem [shape: f32[1,32], index: 7, kind: input, shape index: {}]
  %s8 = inlined_call_operand.vmem [shape: f32[1,32], index: 8, kind: input, shape index: {}]
  %s9 = inlined_call_operand.vmem [shape: bf16[32,32], index: 9, kind: input, shape index: {}]
  %s10 = inlined_call_operand.hbm [shape: f32[1,32], index: 10, kind: input, shape index: {}]
  %s11 = inlined_call_operand.vmem [shape: bf16[2,32,96], index: 11, kind: input, shape index: {}]
  %s12 = inlined_call_operand.vmem [shape: f32[2,1,96], index: 12, kind: input, shape index: {}]
  %s13 = inlined_call_operand.vmem [shape: bf16[2,32,32], index: 13, kind: input, shape index: {}]
  %s14 = inlined_call_operand.vmem [shape: f32[2,1,32], index: 14, kind: input, shape index: {}]
  %s15 = inlined_call_operand.vmem [shape: f32[2,1,32], index: 15, kind: input, shape index: {}]
  %s16 = inlined_call_operand.vmem [shape: f32[2,1,32], index: 16, kind: input, shape index: {}]
  %s17 = inlined_call_operand.vmem [shape: bf16[2,32,64], index: 17, kind: input, shape index: {}]
  %s18 = inlined_call_operand.hbm [shape: f32[2,1,64], index: 18, kind: input, shape index: {}]
  %s19 = inlined_call_operand.vmem [shape: bf16[2,64,32], index: 19, kind: input, shape index: {}]
  %s20 = inlined_call_operand.hbm [shape: f32[2,1,32], index: 20, kind: input, shape index: {}]
  %s21 = inlined_call_operand.vmem [shape: f32[2,1,32], index: 21, kind: input, shape index: {}]
  %s22 = inlined_call_operand.vmem [shape: f32[2,1,32], index: 22, kind: input, shape index: {}]
  %s23 = inlined_call_operand.hbm [shape: f32[16,32], index: 23, kind: output, shape index: {}]
  %s24 = sld [smem:[#allocation0]]
  $region118: #{decoder_forward.1} parent=0
    _
  %s26 = ssub.s32 1, %s24
  %s27 = scalar_select 0, %s26, %s24
  $region1: #{decoder_forward.1} parent=0
    #allocation3 [shape = 'u8[512]{0}', space=vmem, size = 0x400, scoped, tag = 'input window, operand 6, single buffered']
    #allocation4 [shape = 's32[1]{0}', space=sflag, size = 0x4, scoped, tag = 'scoped memory for decoder_forward.1']
    #allocation5 [shape = 's32[1]{0}', space=sflag, size = 0x4, scoped, tag = 'scoped memory for decoder_forward.1']
    #allocation6 [shape = 'u8[512]{0}', space=vmem, size = 0x400, scoped, tag = 'input window, operand 10, single buffered']
    #allocation7 [shape = 's32[1]{0}', space=sflag, size = 0x4, scoped, tag = 'scoped memory for decoder_forward.1']
    #allocation8 [shape = 'u8[1024]{0}', space=vmem, size = 0x400, scoped, tag = 'input window, operand 18, single buffered']
    #allocation9 [shape = 'u8[1024]{0}', space=vmem, size = 0x400, scoped, tag = 'input window, operand 20, single buffered']
    #allocation10 [shape = 's32[1]{0}', space=sflag, size = 0x4, scoped, tag = 'scoped memory for decoder_forward.1']
    #allocation11 [shape = 'u8[8192]{0}', space=vmem, size = 0x2000, scoped, tag = 'output window, operand 0, single buffered']
    %28 = vsyncpa [#allocation4], 0
    %29 = vsyncpa [#allocation7], 0
    %30 = vsyncpa [#allocation10], 0
    %31 = vsyncpa [#allocation5], 0
    // Predicated region
    $region2: #{decoder_forward.1} parent=1 // pred_check
      _
    $region3: #{decoder_forward.1} parent=1 // pred_check_branch
      %33 = sbr.rel (0) target = $region5
    $region4: #{decoder_forward.1} parent=1 // pred_region
      _
    $region5: #{decoder_forward.1} parent=1 // pred_fallthru
      _
    // Predicated region
    $region6: #{decoder_forward.1} parent=1 // pred_check
      _
    $region7: #{decoder_forward.1} parent=1 // pred_check_branch
      %35 = sbr.rel (0) target = $region9
    $region8: #{decoder_forward.1} parent=1 // pred_region
      _
    $region9: #{decoder_forward.1} parent=1 // pred_fallthru
      _
    // Predicated region
    $region10: #{decoder_forward.1} parent=1 // pred_check
      _
    $region11: #{decoder_forward.1} parent=1 // pred_check_branch
      %37 = sbr.rel (0) target = $region13
    $region12: #{decoder_forward.1} parent=1 // pred_region
      _
    $region13: #{decoder_forward.1} parent=1 // pred_fallthru
      _
    // Predicated region
    $region14: #{decoder_forward.1} parent=1 // pred_check
      _
    $region15: #{decoder_forward.1} parent=1 // pred_check_branch
      %39 = sbr.rel (0) target = $region17
    $region16: #{decoder_forward.1} parent=1 // pred_region
      _
    $region17: #{decoder_forward.1} parent=1 // pred_fallthru
      _
    // Predicated region
    $region18: #{decoder_forward.1} parent=1 // pred_check
      _
    $region19: #{decoder_forward.1} parent=1 // pred_check_branch
      %41 = sbr.rel (0) target = $region21
    $region20: #{decoder_forward.1} parent=1 // pred_region
      _
    $region21: #{decoder_forward.1} parent=1 // pred_fallthru
      _
    // Predicated region
    $region22: #{decoder_forward.1} parent=1 // pred_check
      _
    $region23: #{decoder_forward.1} parent=1 // pred_check_branch
      %43 = sbr.rel (0) target = $region25
    $region24: #{decoder_forward.1} parent=1 // pred_region
      _
    $region25: #{decoder_forward.1} parent=1 // pred_fallthru
      _
    // Predicated region
    $region26: #{decoder_forward.1} parent=1 // pred_check
      _
    $region27: #{decoder_forward.1} parent=1 // pred_check_branch
      %45 = sbr.rel (0) target = $region29
    $region28: #{decoder_forward.1} parent=1 // pred_region
      %s47 = ssub.s32 16, 16
      %48 = vsyncadd [#allocation4], %s47
      %s50 = sshll.u32 [#allocation3], 4
      %s51 = int_to_ptr.vmem [resolvable:$true] %s50
      %53 = dma.hbm_to_vmem [thread:$0]  %s6, 16, %s51, [#allocation4]
    $region29: #{decoder_forward.1} parent=1 // pred_fallthru
      _
    // Predicated region
    $region30: #{decoder_forward.1} parent=1 // pred_check
      _
    $region31: #{decoder_forward.1} parent=1 // pred_check_branch
      %55 = sbr.rel (0) target = $region33
    $region32: #{decoder_forward.1} parent=1 // pred_region
      _
    $region33: #{decoder_forward.1} parent=1 // pred_fallthru
      _
    // Predicated region
    $region34: #{decoder_forward.1} parent=1 // pred_check
      _
    $region35: #{decoder_forward.1} parent=1 // pred_check_branch
      %57 = sbr.rel (0) target = $region37
    $region36: #{decoder_forward.1} parent=1 // pred_region
      _
    $region37: #{decoder_forward.1} parent=1 // pred_fallthru
      _
    // Predicated region
    $region38: #{decoder_forward.1} parent=1 // pred_check
      _
    $region39: #{decoder_forward.1} parent=1 // pred_check_branch
      %59 = sbr.rel (0) target = $region41
    $region40: #{decoder_forward.1} parent=1 // pred_region
      _
    $region41: #{decoder_forward.1} parent=1 // pred_fallthru
      _
    // Predicated region
    $region42: #{decoder_forward.1} parent=1 // pred_check
      _
    $region43: #{decoder_forward.1} parent=1 // pred_check_branch
      %61 = sbr.rel (0) target = $region45
    $region44: #{decoder_forward.1} parent=1 // pred_region
      %s63 = ssub.s32 16, 16
      %64 = vsyncadd [#allocation7], %s63
      %s66 = sshll.u32 [#allocation6], 4
      %s67 = int_to_ptr.vmem [resolvable:$true] %s66
      %69 = dma.hbm_to_vmem [thread:$0]  %s10, 16, %s67, [#allocation7]
    $region45: #{decoder_forward.1} parent=1 // pred_fallthru
      _
    // Predicated region
    $region46: #{decoder_forward.1} parent=1 // pred_check
      _
    $region47: #{decoder_forward.1} parent=1 // pred_check_branch
      %71 = sbr.rel (0) target = $region49
    $region48: #{decoder_forward.1} parent=1 // pred_region
      _
    $region49: #{decoder_forward.1} parent=1 // pred_fallthru
      _
    // Predicated region
    $region50: #{decoder_forward.1} parent=1 // pred_check
      _
    $region51: #{decoder_forward.1} parent=1 // pred_check_branch
      %73 = sbr.rel (0) target = $region53
    $region52: #{decoder_forward.1} parent=1 // pred_region
      _
    $region53: #{decoder_forward.1} parent=1 // pred_fallthru
      _
    // Predicated region
    $region54: #{decoder_forward.1} parent=1 // pred_check
      _
    $region55: #{decoder_forward.1} parent=1 // pred_check_branch
      %75 = sbr.rel (0) target = $region57
    $region56: #{decoder_forward.1} parent=1 // pred_region
      _
    $region57: #{decoder_forward.1} parent=1 // pred_fallthru
      _
    // Predicated region
    $region58: #{decoder_forward.1} parent=1 // pred_check
      _
    $region59: #{decoder_forward.1} parent=1 // pred_check_branch
      %77 = sbr.rel (0) target = $region61
    $region60: #{decoder_forward.1} parent=1 // pred_region
      _
    $region61: #{decoder_forward.1} parent=1 // pred_fallthru
      _
    // Predicated region
    $region62: #{decoder_forward.1} parent=1 // pred_check
      _
    $region63: #{decoder_forward.1} parent=1 // pred_check_branch
      %79 = sbr.rel (0) target = $region65
    $region64: #{decoder_forward.1} parent=1 // pred_region
      _
    $region65: #{decoder_forward.1} parent=1 // pred_fallthru
      _
    // Predicated region
    $region66: #{decoder_forward.1} parent=1 // pred_check
      _
    $region67: #{decoder_forward.1} parent=1 // pred_check_branch
      %81 = sbr.rel (0) target = $region69
    $region68: #{decoder_forward.1} parent=1 // pred_region
      _
    $region69: #{decoder_forward.1} parent=1 // pred_fallthru
      _
    // Predicated region
    $region70: #{decoder_forward.1} parent=1 // pred_check
      _
    $region71: #{decoder_forward.1} parent=1 // pred_check_branch
      %83 = sbr.rel (0) target = $region73
    $region72: #{decoder_forward.1} parent=1 // pred_region
      _
    $region73: #{decoder_forward.1} parent=1 // pred_fallthru
      _
    // Predicated region
    $region74: #{decoder_forward.1} parent=1 // pred_check
      _
    $region75: #{decoder_forward.1} parent=1 // pred_check_branch
      %85 = sbr.rel (0) target = $region77
    $region76: #{decoder_forward.1} parent=1 // pred_region
      %s87 = ssub.s32 32, 32
      %88 = vsyncadd [#allocation7], %s87
      %s89 = sshll.u32 [#allocation8], 4
      %s90 = int_to_ptr.vmem [resolvable:$true] %s89
      %95 = dma.hbm_to_vmem [thread:$0]  %s18, 32, %s90, [#allocation7], 16, 16, 1
    $region77: #{decoder_forward.1} parent=1 // pred_fallthru
      _
    // Predicated region
    $region78: #{decoder_forward.1} parent=1 // pred_check
      _
    $region79: #{decoder_forward.1} parent=1 // pred_check_branch
      %97 = sbr.rel (0) target = $region81
    $region80: #{decoder_forward.1} parent=1 // pred_region
      _
    $region81: #{decoder_forward.1} parent=1 // pred_fallthru
      _
    // Predicated region
    $region82: #{decoder_forward.1} parent=1 // pred_check
      _
    $region83: #{decoder_forward.1} parent=1 // pred_check_branch
      %99 = sbr.rel (0) target = $region85
    $region84: #{decoder_forward.1} parent=1 // pred_region
      %s101 = ssub.s32 32, 32
      %102 = vsyncadd [#allocation10], %s101
      %s103 = sshll.u32 [#allocation9], 4
      %s104 = int_to_ptr.vmem [resolvable:$true] %s103
      %109 = dma.hbm_to_vmem [thread:$0]  %s20, 32, %s104, [#allocation10], 16, 16, 1
    $region85: #{decoder_forward.1} parent=1 // pred_fallthru
      _
    // Predicated region
    $region86: #{decoder_forward.1} parent=1 // pred_check
      _
    $region87: #{decoder_forward.1} parent=1 // pred_check_branch
      %111 = sbr.rel (0) target = $region89
    $region88: #{decoder_forward.1} parent=1 // pred_region
      _
    $region89: #{decoder_forward.1} parent=1 // pred_fallthru
      _
    // Predicated region
    $region90: #{decoder_forward.1} parent=1 // pred_check
      _
    $region91: #{decoder_forward.1} parent=1 // pred_check_branch
      %113 = sbr.rel (0) target = $region93
    $region92: #{decoder_forward.1} parent=1 // pred_region
      _
    $region93: #{decoder_forward.1} parent=1 // pred_fallthru
      _
    // Predicated region
    $region94: #{decoder_forward.1} parent=1 // pred_check
      _
    $region95: #{decoder_forward.1} parent=1 // pred_check_branch
      %115 = sbr.rel (0) target = $region97
    $region96: #{decoder_forward.1} parent=1 // pred_region
      %116 = dma.done [#allocation4], 16
    $region97: #{decoder_forward.1} parent=1 // pred_fallthru
      _
    // Predicated region
    $region98: #{decoder_forward.1} parent=1 // pred_check
      _
    $region99: #{decoder_forward.1} parent=1 // pred_check_branch
      %118 = sbr.rel (0) target = $region101
    $region100: #{decoder_forward.1} parent=1 // pred_region
      %119 = dma.done [#allocation7], 16
    $region101: #{decoder_forward.1} parent=1 // pred_fallthru
      _
    // Predicated region
    $region102: #{decoder_forward.1} parent=1 // pred_check
      _
    $region103: #{decoder_forward.1} parent=1 // pred_check_branch
      %121 = sbr.rel (0) target = $region105
    $region104: #{decoder_forward.1} parent=1 // pred_region
      %122 = dma.done [#allocation7], 32
    $region105: #{decoder_forward.1} parent=1 // pred_fallthru
      _
    // Predicated region
    $region106: #{decoder_forward.1} parent=1 // pred_check
      _
    $region107: #{decoder_forward.1} parent=1 // pred_check_branch
      %124 = sbr.rel (0) target = $region109
    $region108: #{decoder_forward.1} parent=1 // pred_region
      %125 = dma.done [#allocation10], 32
    $region109: #{decoder_forward.1} parent=1 // pred_fallthru
      _
    %v127 = vlaneseq
    %v128 = vshrl.u32 %v127, 7
    %v129 = vadd.s32 %v128, 8
    %v130 = vlaneseq
    %v131 = vand.u32 %v130, 127
    %v132 = vshra.s32 %v128, 3
    %v133 = vshra.s32 %v129, 3
    %v134 = vshra.s32 %v131, 3
    %vm135 = vcmp.eq.s32.totalorder %v132, %v134
    %vm136 = vcmp.eq.s32.totalorder %v133, %v134
    %v137 = vld [vmem:[%s3] sm:$0xff]
    %v138 = vld [vmem:[%s3 + $0x8] sm:$0xff]
    %141 = vrot.lane.b32.xlu0 %v137, 8
    %v142 = vpop.permute.xlu0 %141
    %143 = vrot.lane.b32.xlu0 %v138, 8
    %v144 = vpop.permute.xlu0 %143
    %vm147 = vcmask 64512
    %v148 = vsel %vm147, %v137, %v142
    %v149 = vsel %vm147, %v138, %v144
    %vm150 = vcmp.gt.f32.partialorder %v148, 0.0
    %vm151 = vcmp.gt.f32.partialorder %v149, 0.0
    %vm152 = vmand %vm150, %vm135
    %vm153 = vmand %vm151, %vm136
    %v154 = vsel %vm152, 0.0, -1e+09
    %v155 = vsel %vm153, 0.0, -1e+09
    %v156 = vld [vmem:[%s0] sm:$0xf]
    %v157 = vld [vmem:[%s0 + $0x4] sm:$0xf]
    %v158 = vld [vmem:[%s4] sm:$0x3]
    %v159 = vld [vmem:[%s1] sm:$0xf]
    %v160 = vld [vmem:[%s1 + $0x4] sm:$0xf]
    %v161 = vld [vmem:[%s5] sm:$0x1]
    %v164 = vunpack.c.l.b16 %v159
    %v165 = vunpack.c.l.b16 %v160
    %v166 = vpack.c.b16 %v165, %v164
    %vm167 = vcmask 15360
    %v169 = vsel %vm167, %v166, 0
    %vm171 = vcmask 1040384
    %v173 = vsel %vm171, %v161, 0
    %175 = vmatprep.subr.bf16.mxu0 0
    %176 = vmatpush1.bf16.msra.mxu0 0
    %177 = vmatprep.subr.bf16.mxu0 0
    %178 = vmatpush1.bf16.msra.mxu0 0
    %179 = vmatprep.subr.bf16.mxu0 0
    %180 = vmatpush1.bf16.msra.mxu0 0
    %181 = vmatprep.subr.bf16.mxu0 0
    %182 = vmatpush1.bf16.msra.mxu0 0
    %183 = vmatprep.subr.bf16.mxu0 0
    %184 = vmatpush1.bf16.msra.mxu0 0
    %185 = vmatprep.subr.bf16.mxu0 0
    %186 = vmatpush1.bf16.msra.mxu0 0
    %187 = vmatprep.subr.bf16.mxu0 0
    %188 = vmatpush1.bf16.msra.mxu0 0
    %189 = vmatprep.subr.bf16.mxu0 0
    %190 = vmatpush1.bf16.msra.mxu0 %v173
    %191 = vmatprep.subr.bf16.mxu0 0
    %192 = vmatpush2.bf16.msra.mxu0 0
    %193 = vmatprep.subr.bf16.mxu0 0
    %194 = vmatpush2.bf16.msra.mxu0 0
    %195 = vmatprep.subr.bf16.mxu0 0
    %196 = vmatpush2.bf16.msra.mxu0 0
    %197 = vmatprep.subr.bf16.mxu0 0
    %198 = vmatpush2.bf16.msra.mxu0 0
    %199 = vmatprep.subr.bf16.mxu0 0
    %200 = vmatpush2.bf16.msra.mxu0 0
    %201 = vmatprep.subr.bf16.mxu0 0
    %202 = vmatpush2.bf16.msra.mxu0 0
    %203 = vmatprep.subr.bf16.mxu0 0
    %204 = vmatpush2.bf16.msra.mxu0 0
    %205 = vmatprep.subr.bf16.mxu0 0
    %206 = vmatpush2.bf16.msra.mxu0 0
    %207 = vmatprep.mubr.bf16.mxu0 0
    %208 = vmatmul.mubr.bf16.gmra.mxu0 %v169
    %v209 = vpop.f32.mrf.mxu0
    %v210 = vadd.f32 0.0, %v209
    %v211 = vpop.f32.mrf.mxu0
    %v212 = vpop.f32.mrf.mxu0
    %v213 = vadd.f32 0.0, %v212
    %v214 = vpop.f32.mrf.mxu0
    %215 = vdwg.mxu0
    %v218 = vunpack.c.l.b16 %v156
    %v219 = vunpack.c.l.b16 %v157
    %v220 = vpack.c.b16 %v219, %v218
    %vm221 = vcmask 23552
    %v223 = vsel %vm221, %v220, 0
    %vm225 = vcmask 1041408
    %v226 = vsel %vm171, 4294967295, 65535
    %v227 = vsel %vm225, %v226, 0
    %v229 = vand.u32 %v158, %v227
    %231 = vmatprep.subr.bf16.mxu0 0
    %232 = vmatpush1.bf16.msra.mxu0 0
    %233 = vmatprep.subr.bf16.mxu0 0
    %234 = vmatpush1.bf16.msra.mxu0 0
    %235 = vmatprep.subr.bf16.mxu0 0
    %236 = vmatpush1.bf16.msra.mxu0 0
    %237 = vmatprep.subr.bf16.mxu0 0
    %238 = vmatpush1.bf16.msra.mxu0 0
    %239 = vmatprep.subr.bf16.mxu0 0
    %240 = vmatpush1.bf16.msra.mxu0 0
    %241 = vmatprep.subr.bf16.mxu0 0
    %242 = vmatpush1.bf16.msra.mxu0 0
    %243 = vmatprep.subr.bf16.mxu0 0
    %244 = vmatpush1.bf16.msra.mxu0 0
    %245 = vmatprep.subr.bf16.mxu0 0
    %246 = vmatpush1.bf16.msra.mxu0 %v229
    %247 = vmatprep.subr.bf16.mxu0 0
    %248 = vmatpush2.bf16.msra.mxu0 0
    %249 = vmatprep.subr.bf16.mxu0 0
    %250 = vmatpush2.bf16.msra.mxu0 0
    %251 = vmatprep.subr.bf16.mxu0 0
    %252 = vmatpush2.bf16.msra.mxu0 0
    %253 = vmatprep.subr.bf16.mxu0 0
    %254 = vmatpush2.bf16.msra.mxu0 0
    %255 = vmatprep.subr.bf16.mxu0 0
    %256 = vmatpush2.bf16.msra.mxu0 0
    %257 = vmatprep.subr.bf16.mxu0 0
    %258 = vmatpush2.bf16.msra.mxu0 0
    %259 = vmatprep.subr.bf16.mxu0 0
    %260 = vmatpush2.bf16.msra.mxu0 0
    %261 = vmatprep.subr.bf16.mxu0 0
    %262 = vmatpush2.bf16.msra.mxu0 0
    %263 = vmatprep.mubr.bf16.mxu0 0
    %264 = vmatmul.mubr.bf16.gmra.mxu0 %v223
    %v265 = vpop.f32.mrf.mxu0
    %v266 = vadd.f32 %v210, %v265
    %v267 = vpop.f32.mrf.mxu0
    %v268 = vpop.f32.mrf.mxu0
    %v269 = vadd.f32 %v213, %v268
    %v270 = vpop.f32.mrf.mxu0
    %271 = vdwg.mxu0
    %v272 = vld [vmem:[#allocation3] sm:$0x1]
    %v274 = vlaneseq
    %v275 = vshrl.u32 %v274, 7
    %v276 = vsub.s32 0, %v275
    %v277 = vrot.slane %v272, %v276
    %v279 = vadd.f32 %v266, %v277
    %v280 = vadd.f32 %v269, %v277
    %v281 = vmax.f32 %v279, 0.0
    %v282 = vmax.f32 %v280, 0.0
    %v283 = vld [vmem:[%s7] sm:$0x1]
    %v284 = vld [vmem:[%s8] sm:$0x1]
    %vm285 = vcmask 261120
    %v286 = vsel %vm285, %v281, 0.0
    %287 = vadd.xlane.f32.xlu0 %v286
    %v288 = vpop.xlane.xlu0 %287
    %v289 = vsel %vm285, %v282, 0.0
    %290 = vadd.xlane.f32.xlu0 %v289
    %v291 = vpop.xlane.xlu0 %290
    %v292 = vrcp.pop 32.0
    %v293 = vmul.f32 %v288, %v292
    %v294 = vmul.f32 %v291, %v292
    %v295 = vsub.f32 %v281, %v293
    %v296 = vsub.f32 %v282, %v294
    %v297 = vmul.f32 %v295, %v295
    %v298 = vmul.f32 %v296, %v296
    %v299 = vsel %vm285, %v297, 0.0
    %300 = vadd.xlane.f32.xlu0 %v299
    %v301 = vpop.xlane.xlu0 %300
    %v302 = vsel %vm285, %v298, 0.0
    %303 = vadd.xlane.f32.xlu0 %v302
    %v304 = vpop.xlane.xlu0 %303
    %v305 = vmul.f32 %v301, %v292
    %v306 = vmul.f32 %v304, %v292
    %v307 = vadd.f32 %v305, 1e-05
    %v308 = vadd.f32 %v306, 1e-05
    %v309 = vrsqrt.pop %v307
    %v310 = vrsqrt.pop %v308
    %v311 = vmul.f32 %v295, %v309
    %v312 = vmul.f32 %v296, %v310
    %v314 = vlaneseq
    %v315 = vshrl.u32 %v314, 7
    %v316 = vsub.s32 0, %v315
    %v317 = vrot.slane %v283, %v316
    %v319 = vmul.f32 %v311, %v317
    %v320 = vmul.f32 %v312, %v317
    %v322 = vlaneseq
    %v323 = vshrl.u32 %v322, 7
    %v324 = vsub.s32 0, %v323
    %v325 = vrot.slane %v284, %v324
    %v327 = vadd.f32 %v319, %v325
    %v328 = vadd.f32 %v320, %v325
    %v329 = vpack.c.bf16 %v328, %v327
    %v330 = vld [vmem:[%s9] sm:$0xf]
    %v331 = vld [vmem:[%s9 + $0x4] sm:$0xf]
    %v332 = vld [vmem:[%s9 + $0x8] sm:$0xf]
    %v333 = vld [vmem:[%s9 + $0xc] sm:$0xf]
    %v334 = vld [vmem:[#allocation6] sm:$0x1]
    %v336 = vlaneseq
    %v337 = vshrl.u32 %v336, 7
    %v338 = vsub.s32 0, %v337
    %v339 = vrot.slane %v334, %v338
    %v345 = vunpack.c.l.b16 %v330
    %v346 = vunpack.c.l.b16 %v331
    %v347 = vunpack.c.l.b16 %v332
    %v348 = vunpack.c.l.b16 %v333
    %v349 = vpack.c.b16 %v346, %v345
    %v350 = vpack.c.b16 %v348, %v347
    %v354 = vsel %vm285, %v329, 0
    %356 = vmatprep.subr.bf16.mxu0 0
    %357 = vmatpush1.bf16.msra.mxu0 0
    %358 = vmatprep.subr.bf16.mxu0 0
    %359 = vmatpush1.bf16.msra.mxu0 0
    %360 = vmatprep.subr.bf16.mxu0 0
    %361 = vmatpush1.bf16.msra.mxu0 0
    %362 = vmatprep.subr.bf16.mxu0 0
    %363 = vmatpush1.bf16.msra.mxu0 0
    %364 = vmatprep.subr.bf16.mxu0 0
    %365 = vmatpush1.bf16.msra.mxu0 0
    %366 = vmatprep.subr.bf16.mxu0 0
    %367 = vmatpush1.bf16.msra.mxu0 0
    %368 = vmatprep.subr.bf16.mxu0 0
    %369 = vmatpush1.bf16.msra.mxu0 %v350
    %370 = vmatprep.subr.bf16.mxu0 0
    %371 = vmatpush1.bf16.msra.mxu0 %v349
    %372 = vmatprep.subr.bf16.mxu0 0
    %373 = vmatpush2.bf16.msra.mxu0 0
    %374 = vmatprep.subr.bf16.mxu0 0
    %375 = vmatpush2.bf16.msra.mxu0 0
    %376 = vmatprep.subr.bf16.mxu0 0
    %377 = vmatpush2.bf16.msra.mxu0 0
    %378 = vmatprep.subr.bf16.mxu0 0
    %379 = vmatpush2.bf16.msra.mxu0 0
    %380 = vmatprep.subr.bf16.mxu0 0
    %381 = vmatpush2.bf16.msra.mxu0 0
    %382 = vmatprep.subr.bf16.mxu0 0
    %383 = vmatpush2.bf16.msra.mxu0 0
    %384 = vmatprep.subr.bf16.mxu0 0
    %385 = vmatpush2.bf16.msra.mxu0 0
    %386 = vmatprep.subr.bf16.mxu0 0
    %387 = vmatpush2.bf16.msra.mxu0 0
    %388 = vmatprep.mubr.bf16.mxu0 0
    %389 = vmatmul.mubr.bf16.gmra.mxu0 %v354
    %v390 = vpop.f32.mrf.mxu0
    %v391 = vadd.f32 %v339, %v390
    %v392 = vpop.f32.mrf.mxu0
    %v393 = vpop.f32.mrf.mxu0
    %v394 = vadd.f32 %v339, %v393
    %v395 = vpop.f32.mrf.mxu0
    %396 = vdwg.mxu0
    %v397 = vld [vmem:[%s2] sm:$0xff]
    %v398 = vld [vmem:[%s2 + $0x8] sm:$0xff]
    %v399 = vadd.f32 %v391, %v397
    %v400 = vadd.f32 %v394, %v398
    %v401 = vpack.c.bf16 %v400, %v399
    %v402 = vld [vmem:[%s11] sm:$0xf]
    %v403 = vld [vmem:[%s11 + $0x4] sm:$0xf]
    %v404 = vld [vmem:[%s11 + $0x8] sm:$0xf]
    %v405 = vld [vmem:[%s11 + $0xc] sm:$0xf]
    %v406 = vld [vmem:[%s12] sm:$0x1]
    %v408 = vlaneseq
    %v409 = vshrl.u32 %v408, 7
    %v410 = vsub.s32 0, %v409
    %v411 = vrot.slane %v406, %v410
    %v417 = vunpack.c.l.b16 %v402
    %v418 = vunpack.c.l.b16 %v403
    %v419 = vunpack.c.l.b16 %v404
    %v420 = vunpack.c.l.b16 %v405
    %v421 = vpack.c.b16 %v418, %v417
    %v422 = vpack.c.b16 %v420, %v419
    %v426 = vsel %vm285, %v401, 0
    %428 = vmatprep.subr.bf16.mxu0 0
    %429 = vmatpush1.bf16.msra.mxu0 0
    %430 = vmatprep.subr.bf16.mxu0 0
    %431 = vmatpush1.bf16.msra.mxu0 0
    %432 = vmatprep.subr.bf16.mxu0 0
    %433 = vmatpush1.bf16.msra.mxu0 0
    %434 = vmatprep.subr.bf16.mxu0 0
    %435 = vmatpush1.bf16.msra.mxu0 0
    %436 = vmatprep.subr.bf16.mxu0 0
    %437 = vmatpush1.bf16.msra.mxu0 0
    %438 = vmatprep.subr.bf16.mxu0 0
    %439 = vmatpush1.bf16.msra.mxu0 0
    %440 = vmatprep.subr.bf16.mxu0 0
    %441 = vmatpush1.bf16.msra.mxu0 %v422
    %442 = vmatprep.subr.bf16.mxu0 0
    %443 = vmatpush1.bf16.msra.mxu0 %v421
    %444 = vmatprep.subr.bf16.mxu0 0
    %445 = vmatpush2.bf16.msra.mxu0 0
    %446 = vmatprep.subr.bf16.mxu0 0
    %447 = vmatpush2.bf16.msra.mxu0 0
    %448 = vmatprep.subr.bf16.mxu0 0
    %449 = vmatpush2.bf16.msra.mxu0 0
    %450 = vmatprep.subr.bf16.mxu0 0
    %451 = vmatpush2.bf16.msra.mxu0 0
    %452 = vmatprep.subr.bf16.mxu0 0
    %453 = vmatpush2.bf16.msra.mxu0 0
    %454 = vmatprep.subr.bf16.mxu0 0
    %455 = vmatpush2.bf16.msra.mxu0 0
    %456 = vmatprep.subr.bf16.mxu0 0
    %457 = vmatpush2.bf16.msra.mxu0 0
    %458 = vmatprep.subr.bf16.mxu0 0
    %459 = vmatpush2.bf16.msra.mxu0 0
    %460 = vmatprep.mubr.bf16.mxu0 0
    %461 = vmatmul.mubr.bf16.gmra.mxu0 %v426
    %v462 = vpop.f32.mrf.mxu0
    %v463 = vadd.f32 %v411, %v462
    %v464 = vpop.f32.mrf.mxu0
    %v465 = vpop.f32.mrf.mxu0
    %v466 = vadd.f32 %v411, %v465
    %v467 = vpop.f32.mrf.mxu0
    %468 = vdwg.mxu0
    %v469 = vpack.c.bf16 %v466, %v463
    %471 = vrot.lane.b32.xlu0 %v469, 96
    %v472 = vpop.permute.xlu0 %471
    %v474 = vsel %vm147, %v469, 0
    %v477 = vsel %vm147, %v472, 0
    %479 = vmatprep.subr.bf16.mxu0 0
    %480 = vmatpush1.bf16.xpose.msra.mxu0 0
    %481 = vmatprep.subr.bf16.mxu0 0
    %482 = vmatpush1.bf16.xpose.msra.mxu0 0
    %483 = vmatprep.subr.bf16.mxu0 0
    %484 = vmatpush1.bf16.xpose.msra.mxu0 0
    %485 = vmatprep.subr.bf16.mxu0 0
    %486 = vmatpush1.bf16.xpose.msra.mxu0 0
    %487 = vmatprep.subr.bf16.mxu0 0
    %488 = vmatpush1.bf16.xpose.msra.mxu0 0
    %489 = vmatprep.subr.bf16.mxu0 0
    %490 = vmatpush1.bf16.xpose.msra.mxu0 0
    %491 = vmatprep.subr.bf16.mxu0 0
    %492 = vmatpush1.bf16.xpose.msra.mxu0 0
    %493 = vmatprep.subr.bf16.mxu0 0
    %494 = vmatpush1.bf16.xpose.msra.mxu0 %v477
    %495 = vmatprep.subr.bf16.mxu0 0
    %496 = vmatpush2.bf16.xpose.msra.mxu0 0
    %497 = vmatprep.subr.bf16.mxu0 0
    %498 = vmatpush2.bf16.xpose.msra.mxu0 0
    %499 = vmatprep.subr.bf16.mxu0 0
    %500 = vmatpush2.bf16.xpose.msra.mxu0 0
    %501 = vmatprep.subr.bf16.mxu0 0
    %502 = vmatpush2.bf16.xpose.msra.mxu0 0
    %503 = vmatprep.subr.bf16.mxu0 0
    %504 = vmatpush2.bf16.xpose.msra.mxu0 0
    %505 = vmatprep.subr.bf16.mxu0 0
    %506 = vmatpush2.bf16.xpose.msra.mxu0 0
    %507 = vmatprep.subr.bf16.mxu0 0
    %508 = vmatpush2.bf16.xpose.msra.mxu0 0
    %509 = vmatprep.subr.bf16.mxu0 0
    %510 = vmatpush2.bf16.xpose.msra.mxu0 0
    %511 = vmatprep.mubr.bf16.mxu0 0
    %512 = vmatmul.mubr.bf16.gmra.mxu0 %v474
    %v513 = vpop.f32.mrf.mxu0
    %v514 = vadd.f32 %v154, %v513
    %v515 = vpop.f32.mrf.mxu0
    %v516 = vpop.f32.mrf.mxu0
    %v517 = vadd.f32 %v155, %v516
    %v518 = vpop.f32.mrf.mxu0
    %519 = vdwg.mxu0
    %vm520 = vcmask 130048
    %v521 = vsel %vm520, %v514, -inf
    %522 = vmax.xlane.f32.xlu0 %v521
    %v523 = vpop.xlane.xlu0 %522
    %v524 = vsel %vm520, %v517, -inf
    %525 = vmax.xlane.f32.xlu0 %v524
    %v526 = vpop.xlane.xlu0 %525
    %v527 = vsub.f32 %v514, %v523
    %v528 = vsub.f32 %v517, %v526
    %v529 = vmul.f32 %v527, 1.442695
    %v530 = vpow.pop %v529
    %v531 = vmul.f32 %v528, 1.442695
    %v532 = vpow.pop %v531
    %v533 = vsel %vm520, %v530, 0.0
    %534 = vadd.xlane.f32.xlu0 %v533
    %v535 = vpop.xlane.xlu0 %534
    %v536 = vsel %vm520, %v532, 0.0
    %537 = vadd.xlane.f32.xlu0 %v536
    %v538 = vpop.xlane.xlu0 %537
    %v539 = vrcp.pop %v535
    %v540 = vrcp.pop %v538
    %v541 = vmul.f32 %v530, %v539
    %v542 = vmul.f32 %v532, %v540
    %v543 = vpack.c.bf16 %v542, %v541
    %544 = vrot.lane.b32.xlu0 %v469, 64
    %v545 = vpop.permute.xlu0 %544
    %v548 = vsel %vm520, %v543, 0
    %550 = vmatprep.subr.bf16.mxu0 0
    %551 = vmatpush1.bf16.msra.mxu0 0
    %552 = vmatprep.subr.bf16.mxu0 0
    %553 = vmatpush1.bf16.msra.mxu0 0
    %554 = vmatprep.subr.bf16.mxu0 0
    %555 = vmatpush1.bf16.msra.mxu0 0
    %556 = vmatprep.subr.bf16.mxu0 0
    %557 = vmatpush1.bf16.msra.mxu0 0
    %558 = vmatprep.subr.bf16.mxu0 0
    %559 = vmatpush1.bf16.msra.mxu0 0
    %560 = vmatprep.subr.bf16.mxu0 0
    %561 = vmatpush1.bf16.msra.mxu0 0
    %562 = vmatprep.subr.bf16.mxu0 0
    %563 = vmatpush1.bf16.msra.mxu0 0
    %564 = vmatprep.subr.bf16.mxu0 0
    %565 = vmatpush1.bf16.msra.mxu0 %v545
    %566 = vmatprep.subr.bf16.mxu0 0
    %567 = vmatpush2.bf16.msra.mxu0 0
    %568 = vmatprep.subr.bf16.mxu0 0
    %569 = vmatpush2.bf16.msra.mxu0 0
    %570 = vmatprep.subr.bf16.mxu0 0
    %571 = vmatpush2.bf16.msra.mxu0 0
    %572 = vmatprep.subr.bf16.mxu0 0
    %573 = vmatpush2.bf16.msra.mxu0 0
    %574 = vmatprep.subr.bf16.mxu0 0
    %575 = vmatpush2.bf16.msra.mxu0 0
    %576 = vmatprep.subr.bf16.mxu0 0
    %577 = vmatpush2.bf16.msra.mxu0 0
    %578 = vmatprep.subr.bf16.mxu0 0
    %579 = vmatpush2.bf16.msra.mxu0 0
    %580 = vmatprep.subr.bf16.mxu0 0
    %581 = vmatpush2.bf16.msra.mxu0 0
    %582 = vmatprep.mubr.bf16.mxu0 0
    %583 = vmatmul.mubr.bf16.gmra.mxu0 %v548
    %v584 = vpop.f32.mrf.mxu0
    %v585 = vadd.f32 0.0, %v584
    %v586 = vpop.f32.mrf.mxu0
    %v587 = vpop.f32.mrf.mxu0
    %v588 = vadd.f32 0.0, %v587
    %v589 = vpop.f32.mrf.mxu0
    %590 = vdwg.mxu0
    %591 = vst.msk [vmem:[#allocation2] sm:$0xff] %vm147, %v585
    %592 = vst.msk [vmem:[#allocation2 + $0x8] sm:$0xff] %vm147, %v588
    %593 = vrot.lane.b32.xlu0 %v469, 120
    %v594 = vpop.permute.xlu0 %593
    %595 = vrot.lane.b32.xlu0 %v469, 88
    %v596 = vpop.permute.xlu0 %595
    %v598 = vsel %vm147, %v594, 0
    %v601 = vsel %vm147, %v596, 0
    %603 = vmatprep.subr.bf16.mxu0 0
    %604 = vmatpush1.bf16.xpose.msra.mxu0 0
    %605 = vmatprep.subr.bf16.mxu0 0
    %606 = vmatpush1.bf16.xpose.msra.mxu0 0
    %607 = vmatprep.subr.bf16.mxu0 0
    %608 = vmatpush1.bf16.xpose.msra.mxu0 0
    %609 = vmatprep.subr.bf16.mxu0 0
    %610 = vmatpush1.bf16.xpose.msra.mxu0 0
    %611 = vmatprep.subr.bf16.mxu0 0
    %612 = vmatpush1.bf16.xpose.msra.mxu0 0
    %613 = vmatprep.subr.bf16.mxu0 0
    %614 = vmatpush1.bf16.xpose.msra.mxu0 0
    %615 = vmatprep.subr.bf16.mxu0 0
    %616 = vmatpush1.bf16.xpose.msra.mxu0 0
    %617 = vmatprep.subr.bf16.mxu0 0
    %618 = vmatpush1.bf16.xpose.msra.mxu0 %v601
    %619 = vmatprep.subr.bf16.mxu0 0
    %620 = vmatpush2.bf16.xpose.msra.mxu0 0
    %621 = vmatprep.subr.bf16.mxu0 0
    %622 = vmatpush2.bf16.xpose.msra.mxu0 0
    %623 = vmatprep.subr.bf16.mxu0 0
    %624 = vmatpush2.bf16.xpose.msra.mxu0 0
    %625 = vmatprep.subr.bf16.mxu0 0
    %626 = vmatpush2.bf16.xpose.msra.mxu0 0
    %627 = vmatprep.subr.bf16.mxu0 0
    %628 = vmatpush2.bf16.xpose.msra.mxu0 0
    %629 = vmatprep.subr.bf16.mxu0 0
    %630 = vmatpush2.bf16.xpose.msra.mxu0 0
    %631 = vmatprep.subr.bf16.mxu0 0
    %632 = vmatpush2.bf16.xpose.msra.mxu0 0
    %633 = vmatprep.subr.bf16.mxu0 0
    %634 = vmatpush2.bf16.xpose.msra.mxu0 0
    %635 = vmatprep.mubr.bf16.mxu0 0
    %636 = vmatmul.mubr.bf16.gmra.mxu0 %v598
    %v637 = vpop.f32.mrf.mxu0
    %v638 = vadd.f32 %v154, %v637
    %v639 = vpop.f32.mrf.mxu0
    %v640 = vpop.f32.mrf.mxu0
    %v641 = vadd.f32 %v155, %v640
    %v642 = vpop.f32.mrf.mxu0
    %643 = vdwg.mxu0
    %v644 = vsel %vm520, %v638, -inf
    %645 = vmax.xlane.f32.xlu0 %v644
    %v646 = vpop.xlane.xlu0 %645
    %v647 = vsel %vm520, %v641, -inf
    %648 = vmax.xlane.f32.xlu0 %v647
    %v649 = vpop.xlane.xlu0 %648
    %v650 = vsub.f32 %v638, %v646
    %v651 = vsub.f32 %v641, %v649
    %v652 = vmul.f32 %v650, 1.442695
    %v653 = vpow.pop %v652
    %v654 = vmul.f32 %v651, 1.442695
    %v655 = vpow.pop %v654
    %v656 = vsel %vm520, %v653, 0.0
    %657 = vadd.xlane.f32.xlu0 %v656
    %v658 = vpop.xlane.xlu0 %657
    %v659 = vsel %vm520, %v655, 0.0
    %660 = vadd.xlane.f32.xlu0 %v659
    %v661 = vpop.xlane.xlu0 %660
    %v662 = vrcp.pop %v658
    %v663 = vrcp.pop %v661
    %v664 = vmul.f32 %v653, %v662
    %v665 = vmul.f32 %v655, %v663
    %v666 = vpack.c.bf16 %v665, %v664
    %667 = vrot.lane.b32.xlu0 %v469, 56
    %v668 = vpop.permute.xlu0 %667
    %v671 = vsel %vm520, %v666, 0
    %673 = vmatprep.subr.bf16.mxu0 0
    %674 = vmatpush1.bf16.msra.mxu0 0
    %675 = vmatprep.subr.bf16.mxu0 0
    %676 = vmatpush1.bf16.msra.mxu0 0
    %677 = vmatprep.subr.bf16.mxu0 0
    %678 = vmatpush1.bf16.msra.mxu0 0
    %679 = vmatprep.subr.bf16.mxu0 0
    %680 = vmatpush1.bf16.msra.mxu0 0
    %681 = vmatprep.subr.bf16.mxu0 0
    %682 = vmatpush1.bf16.msra.mxu0 0
    %683 = vmatprep.subr.bf16.mxu0 0
    %684 = vmatpush1.bf16.msra.mxu0 0
    %685 = vmatprep.subr.bf16.mxu0 0
    %686 = vmatpush1.bf16.msra.mxu0 0
    %687 = vmatprep.subr.bf16.mxu0 0
    %688 = vmatpush1.bf16.msra.mxu0 %v668
    %689 = vmatprep.subr.bf16.mxu0 0
    %690 = vmatpush2.bf16.msra.mxu0 0
    %691 = vmatprep.subr.bf16.mxu0 0
    %692 = vmatpush2.bf16.msra.mxu0 0
    %693 = vmatprep.subr.bf16.mxu0 0
    %694 = vmatpush2.bf16.msra.mxu0 0
    %695 = vmatprep.subr.bf16.mxu0 0
    %696 = vmatpush2.bf16.msra.mxu0 0
    %697 = vmatprep.subr.bf16.mxu0 0
    %698 = vmatpush2.bf16.msra.mxu0 0
    %699 = vmatprep.subr.bf16.mxu0 0
    %700 = vmatpush2.bf16.msra.mxu0 0
    %701 = vmatprep.subr.bf16.mxu0 0
    %702 = vmatpush2.bf16.msra.mxu0 0
    %703 = vmatprep.subr.bf16.mxu0 0
    %704 = vmatpush2.bf16.msra.mxu0 0
    %705 = vmatprep.mubr.bf16.mxu0 0
    %706 = vmatmul.mubr.bf16.gmra.mxu0 %v671
    %v707 = vpop.f32.mrf.mxu0
    %v708 = vadd.f32 0.0, %v707
    %v709 = vpop.f32.mrf.mxu0
    %v710 = vpop.f32.mrf.mxu0
    %v711 = vadd.f32 0.0, %v710
    %v712 = vpop.f32.mrf.mxu0
    %713 = vdwg.mxu0
    %716 = vrot.lane.b32.xlu0 %v708, 8
    %v717 = vpop.permute.xlu0 %716
    %718 = vrot.lane.b32.xlu0 %v711, 8
    %v719 = vpop.permute.xlu0 %718
    %vm722 = vcmask 130112
    %723 = vst.msk [vmem:[#allocation2] sm:$0xff] %vm722, %v717
    %724 = vst.msk [vmem:[#allocation2 + $0x8] sm:$0xff] %vm722, %v719
    %725 = vrot.lane.b32.xlu0 %v469, 112
    %v726 = vpop.permute.xlu0 %725
    %727 = vrot.lane.b32.xlu0 %v469, 80
    %v728 = vpop.permute.xlu0 %727
    %v730 = vsel %vm147, %v726, 0
    %v733 = vsel %vm147, %v728, 0
    %735 = vmatprep.subr.bf16.mxu0 0
    %736 = vmatpush1.bf16.xpose.msra.mxu0 0
    %737 = vmatprep.subr.bf16.mxu0 0
    %738 = vmatpush1.bf16.xpose.msra.mxu0 0
    %739 = vmatprep.subr.bf16.mxu0 0
    %740 = vmatpush1.bf16.xpose.msra.mxu0 0
    %741 = vmatprep.subr.bf16.mxu0 0
    %742 = vmatpush1.bf16.xpose.msra.mxu0 0
    %743 = vmatprep.subr.bf16.mxu0 0
    %744 = vmatpush1.bf16.xpose.msra.mxu0 0
    %745 = vmatprep.subr.bf16.mxu0 0
    %746 = vmatpush1.bf16.xpose.msra.mxu0 0
    %747 = vmatprep.subr.bf16.mxu0 0
    %748 = vmatpush1.bf16.xpose.msra.mxu0 0
    %749 = vmatprep.subr.bf16.mxu0 0
    %750 = vmatpush1.bf16.xpose.msra.mxu0 %v733
    %751 = vmatprep.subr.bf16.mxu0 0
    %752 = vmatpush2.bf16.xpose.msra.mxu0 0
    %753 = vmatprep.subr.bf16.mxu0 0
    %754 = vmatpush2.bf16.xpose.msra.mxu0 0
    %755 = vmatprep.subr.bf16.mxu0 0
    %756 = vmatpush2.bf16.xpose.msra.mxu0 0
    %757 = vmatprep.subr.bf16.mxu0 0
    %758 = vmatpush2.bf16.xpose.msra.mxu0 0
    %759 = vmatprep.subr.bf16.mxu0 0
    %760 = vmatpush2.bf16.xpose.msra.mxu0 0
    %761 = vmatprep.subr.bf16.mxu0 0
    %762 = vmatpush2.bf16.xpose.msra.mxu0 0
    %763 = vmatprep.subr.bf16.mxu0 0
    %764 = vmatpush2.bf16.xpose.msra.mxu0 0
    %765 = vmatprep.subr.bf16.mxu0 0
    %766 = vmatpush2.bf16.xpose.msra.mxu0 0
    %767 = vmatprep.mubr.bf16.mxu0 0
    %768 = vmatmul.mubr.bf16.gmra.mxu0 %v730
    %v769 = vpop.f32.mrf.mxu0
    %v770 = vadd.f32 %v154, %v769
    %v771 = vpop.f32.mrf.mxu0
    %v772 = vpop.f32.mrf.mxu0
    %v773 = vadd.f32 %v155, %v772
    %v774 = vpop.f32.mrf.mxu0
    %775 = vdwg.mxu0
    %v776 = vsel %vm520, %v770, -inf
    %777 = vmax.xlane.f32.xlu0 %v776
    %v778 = vpop.xlane.xlu0 %777
    %v779 = vsel %vm520, %v773, -inf
    %780 = vmax.xlane.f32.xlu0 %v779
    %v781 = vpop.xlane.xlu0 %780
    %v782 = vsub.f32 %v770, %v778
    %v783 = vsub.f32 %v773, %v781
    %v784 = vmul.f32 %v782, 1.442695
    %v785 = vpow.pop %v784
    %v786 = vmul.f32 %v783, 1.442695
    %v787 = vpow.pop %v786
    %v788 = vsel %vm520, %v785, 0.0
    %789 = vadd.xlane.f32.xlu0 %v788
    %v790 = vpop.xlane.xlu0 %789
    %v791 = vsel %vm520, %v787, 0.0
    %792 = vadd.xlane.f32.xlu0 %v791
    %v793 = vpop.xlane.xlu0 %792
    %v794 = vrcp.pop %v790
    %v795 = vrcp.pop %v793
    %v796 = vmul.f32 %v785, %v794
    %v797 = vmul.f32 %v787, %v795
    %v798 = vpack.c.bf16 %v797, %v796
    %799 = vrot.lane.b32.xlu0 %v469, 48
    %v800 = vpop.permute.xlu0 %799
    %v803 = vsel %vm520, %v798, 0
    %805 = vmatprep.subr.bf16.mxu0 0
    %806 = vmatpush1.bf16.msra.mxu0 0
    %807 = vmatprep.subr.bf16.mxu0 0
    %808 = vmatpush1.bf16.msra.mxu0 0
    %809 = vmatprep.subr.bf16.mxu0 0
    %810 = vmatpush1.bf16.msra.mxu0 0
    %811 = vmatprep.subr.bf16.mxu0 0
    %812 = vmatpush1.bf16.msra.mxu0 0
    %813 = vmatprep.subr.bf16.mxu0 0
    %814 = vmatpush1.bf16.msra.mxu0 0
    %815 = vmatprep.subr.bf16.mxu0 0
    %816 = vmatpush1.bf16.msra.mxu0 0
    %817 = vmatprep.subr.bf16.mxu0 0
    %818 = vmatpush1.bf16.msra.mxu0 0
    %819 = vmatprep.subr.bf16.mxu0 0
    %820 = vmatpush1.bf16.msra.mxu0 %v800
    %821 = vmatprep.subr.bf16.mxu0 0
    %822 = vmatpush2.bf16.msra.mxu0 0
    %823 = vmatprep.subr.bf16.mxu0 0
    %824 = vmatpush2.bf16.msra.mxu0 0
    %825 = vmatprep.subr.bf16.mxu0 0
    %826 = vmatpush2.bf16.msra.mxu0 0
    %827 = vmatprep.subr.bf16.mxu0 0
    %828 = vmatpush2.bf16.msra.mxu0 0
    %829 = vmatprep.subr.bf16.mxu0 0
    %830 = vmatpush2.bf16.msra.mxu0 0
    %831 = vmatprep.subr.bf16.mxu0 0
    %832 = vmatpush2.bf16.msra.mxu0 0
    %833 = vmatprep.subr.bf16.mxu0 0
    %834 = vmatpush2.bf16.msra.mxu0 0
    %835 = vmatprep.subr.bf16.mxu0 0
    %836 = vmatpush2.bf16.msra.mxu0 0
    %837 = vmatprep.mubr.bf16.mxu0 0
    %838 = vmatmul.mubr.bf16.gmra.mxu0 %v803
    %v839 = vpop.f32.mrf.mxu0
    %v840 = vadd.f32 0.0, %v839
    %v841 = vpop.f32.mrf.mxu0
    %v842 = vpop.f32.mrf.mxu0
    %v843 = vadd.f32 0.0, %v842
    %v844 = vpop.f32.mrf.mxu0
    %845 = vdwg.mxu0
    %848 = vrot.lane.b32.xlu0 %v840, 16
    %v849 = vpop.permute.xlu0 %848
    %850 = vrot.lane.b32.xlu0 %v843, 16
    %v851 = vpop.permute.xlu0 %850
    %vm854 = vcmask 195712
    %855 = vst.msk [vmem:[#allocation2] sm:$0xff] %vm854, %v849
    %856 = vst.msk [vmem:[#allocation2 + $0x8] sm:$0xff] %vm854, %v851
    %857 = vrot.lane.b32.xlu0 %v469, 104
    %v858 = vpop.permute.xlu0 %857
    %859 = vrot.lane.b32.xlu0 %v469, 72
    %v860 = vpop.permute.xlu0 %859
    %v862 = vsel %vm147, %v858, 0
    %v865 = vsel %vm147, %v860, 0
    %867 = vmatprep.subr.bf16.mxu0 0
    %868 = vmatpush1.bf16.xpose.msra.mxu0 0
    %869 = vmatprep.subr.bf16.mxu0 0
    %870 = vmatpush1.bf16.xpose.msra.mxu0 0
    %871 = vmatprep.subr.bf16.mxu0 0
    %872 = vmatpush1.bf16.xpose.msra.mxu0 0
    %873 = vmatprep.subr.bf16.mxu0 0
    %874 = vmatpush1.bf16.xpose.msra.mxu0 0
    %875 = vmatprep.subr.bf16.mxu0 0
    %876 = vmatpush1.bf16.xpose.msra.mxu0 0
    %877 = vmatprep.subr.bf16.mxu0 0
    %878 = vmatpush1.bf16.xpose.msra.mxu0 0
    %879 = vmatprep.subr.bf16.mxu0 0
    %880 = vmatpush1.bf16.xpose.msra.mxu0 0
    %881 = vmatprep.subr.bf16.mxu0 0
    %882 = vmatpush1.bf16.xpose.msra.mxu0 %v865
    %883 = vmatprep.subr.bf16.mxu0 0
    %884 = vmatpush2.bf16.xpose.msra.mxu0 0
    %885 = vmatprep.subr.bf16.mxu0 0
    %886 = vmatpush2.bf16.xpose.msra.mxu0 0
    %887 = vmatprep.subr.bf16.mxu0 0
    %888 = vmatpush2.bf16.xpose.msra.mxu0 0
    %889 = vmatprep.subr.bf16.mxu0 0
    %890 = vmatpush2.bf16.xpose.msra.mxu0 0
    %891 = vmatprep.subr.bf16.mxu0 0
    %892 = vmatpush2.bf16.xpose.msra.mxu0 0
    %893 = vmatprep.subr.bf16.mxu0 0
    %894 = vmatpush2.bf16.xpose.msra.mxu0 0
    %895 = vmatprep.subr.bf16.mxu0 0
    %896 = vmatpush2.bf16.xpose.msra.mxu0 0
    %897 = vmatprep.subr.bf16.mxu0 0
    %898 = vmatpush2.bf16.xpose.msra.mxu0 0
    %899 = vmatprep.mubr.bf16.mxu0 0
    %900 = vmatmul.mubr.bf16.gmra.mxu0 %v862
    %v901 = vpop.f32.mrf.mxu0
    %v902 = vadd.f32 %v154, %v901
    %v903 = vpop.f32.mrf.mxu0
    %v904 = vpop.f32.mrf.mxu0
    %v905 = vadd.f32 %v155, %v904
    %v906 = vpop.f32.mrf.mxu0
    %907 = vdwg.mxu0
    %v908 = vsel %vm520, %v902, -inf
    %909 = vmax.xlane.f32.xlu0 %v908
    %v910 = vpop.xlane.xlu0 %909
    %v911 = vsel %vm520, %v905, -inf
    %912 = vmax.xlane.f32.xlu0 %v911
    %v913 = vpop.xlane.xlu0 %912
    %v914 = vsub.f32 %v902, %v910
    %v915 = vsub.f32 %v905, %v913
    %v916 = vmul.f32 %v914, 1.442695
    %v917 = vpow.pop %v916
    %v918 = vmul.f32 %v915, 1.442695
    %v919 = vpow.pop %v918
    %v920 = vsel %vm520, %v917, 0.0
    %921 = vadd.xlane.f32.xlu0 %v920
    %v922 = vpop.xlane.xlu0 %921
    %v923 = vsel %vm520, %v919, 0.0
    %924 = vadd.xlane.f32.xlu0 %v923
    %v925 = vpop.xlane.xlu0 %924
    %v926 = vrcp.pop %v922
    %v927 = vrcp.pop %v925
    %v928 = vmul.f32 %v917, %v926
    %v929 = vmul.f32 %v919, %v927
    %v930 = vpack.c.bf16 %v929, %v928
    %931 = vrot.lane.b32.xlu0 %v469, 40
    %v932 = vpop.permute.xlu0 %931
    %v935 = vsel %vm520, %v930, 0
    %937 = vmatprep.subr.bf16.mxu0 0
    %938 = vmatpush1.bf16.msra.mxu0 0
    %939 = vmatprep.subr.bf16.mxu0 0
    %940 = vmatpush1.bf16.msra.mxu0 0
    %941 = vmatprep.subr.bf16.mxu0 0
    %942 = vmatpush1.bf16.msra.mxu0 0
    %943 = vmatprep.subr.bf16.mxu0 0
    %944 = vmatpush1.bf16.msra.mxu0 0
    %945 = vmatprep.subr.bf16.mxu0 0
    %946 = vmatpush1.bf16.msra.mxu0 0
    %947 = vmatprep.subr.bf16.mxu0 0
    %948 = vmatpush1.bf16.msra.mxu0 0
    %949 = vmatprep.subr.bf16.mxu0 0
    %950 = vmatpush1.bf16.msra.mxu0 0
    %951 = vmatprep.subr.bf16.mxu0 0
    %952 = vmatpush1.bf16.msra.mxu0 %v932
    %953 = vmatprep.subr.bf16.mxu0 0
    %954 = vmatpush2.bf16.msra.mxu0 0
    %955 = vmatprep.subr.bf16.mxu0 0
    %956 = vmatpush2.bf16.msra.mxu0 0
    %957 = vmatprep.subr.bf16.mxu0 0
    %958 = vmatpush2.bf16.msra.mxu0 0
    %959 = vmatprep.subr.bf16.mxu0 0
    %960 = vmatpush2.bf16.msra.mxu0 0
    %961 = vmatprep.subr.bf16.mxu0 0
    %962 = vmatpush2.bf16.msra.mxu0 0
    %963 = vmatprep.subr.bf16.mxu0 0
    %964 = vmatpush2.bf16.msra.mxu0 0
    %965 = vmatprep.subr.bf16.mxu0 0
    %966 = vmatpush2.bf16.msra.mxu0 0
    %967 = vmatprep.subr.bf16.mxu0 0
    %968 = vmatpush2.bf16.msra.mxu0 0
    %969 = vmatprep.mubr.bf16.mxu0 0
    %970 = vmatmul.mubr.bf16.gmra.mxu0 %v935
    %v971 = vpop.f32.mrf.mxu0
    %v972 = vadd.f32 0.0, %v971
    %v973 = vpop.f32.mrf.mxu0
    %v974 = vpop.f32.mrf.mxu0
    %v975 = vadd.f32 0.0, %v974
    %v976 = vpop.f32.mrf.mxu0
    %977 = vdwg.mxu0
    %980 = vrot.lane.b32.xlu0 %v972, 24
    %v981 = vpop.permute.xlu0 %980
    %982 = vrot.lane.b32.xlu0 %v975, 24
    %v983 = vpop.permute.xlu0 %982
    %vm986 = vcmask 261312
    %987 = vst.msk [vmem:[#allocation2] sm:$0xff] %vm986, %v981
    %988 = vst.msk [vmem:[#allocation2 + $0x8] sm:$0xff] %vm986, %v983
    %s989 = scalar_lea.vmem %s11, 16
    %v990 = vld [vmem:[%s989] sm:$0xf]
    %v991 = vld [vmem:[%s989 + $0x4] sm:$0xf]
    %v992 = vld [vmem:[%s989 + $0x8] sm:$0xf]
    %v993 = vld [vmem:[%s989 + $0xc] sm:$0xf]
    %s994 = scalar_lea.vmem %s12, 1
    %v995 = vld [vmem:[%s994] sm:$0x1]
    %v997 = vlaneseq
    %v998 = vshrl.u32 %v997, 7
    %v999 = vsub.s32 0, %v998
    %v1000 = vrot.slane %v995, %v999
    %v1006 = vunpack.c.l.b16 %v990
    %v1007 = vunpack.c.l.b16 %v991
    %v1008 = vunpack.c.l.b16 %v992
    %v1009 = vunpack.c.l.b16 %v993
    %v1010 = vpack.c.b16 %v1007, %v1006
    %v1011 = vpack.c.b16 %v1009, %v1008
    %1014 = vmatprep.subr.bf16.mxu0 0
    %1015 = vmatpush1.bf16.msra.mxu0 0
    %1016 = vmatprep.subr.bf16.mxu0 0
    %1017 = vmatpush1.bf16.msra.mxu0 0
    %1018 = vmatprep.subr.bf16.mxu0 0
    %1019 = vmatpush1.bf16.msra.mxu0 0
    %1020 = vmatprep.subr.bf16.mxu0 0
    %1021 = vmatpush1.bf16.msra.mxu0 0
    %1022 = vmatprep.subr.bf16.mxu0 0
    %1023 = vmatpush1.bf16.msra.mxu0 0
    %1024 = vmatprep.subr.bf16.mxu0 0
    %1025 = vmatpush1.bf16.msra.mxu0 0
    %1026 = vmatprep.subr.bf16.mxu0 0
    %1027 = vmatpush1.bf16.msra.mxu0 %v1011
    %1028 = vmatprep.subr.bf16.mxu0 0
    %1029 = vmatpush1.bf16.msra.mxu0 %v1010
    %1030 = vmatprep.subr.bf16.mxu0 0
    %1031 = vmatpush2.bf16.msra.mxu0 0
    %1032 = vmatprep.subr.bf16.mxu0 0
    %1033 = vmatpush2.bf16.msra.mxu0 0
    %1034 = vmatprep.subr.bf16.mxu0 0
    %1035 = vmatpush2.bf16.msra.mxu0 0
    %1036 = vmatprep.subr.bf16.mxu0 0
    %1037 = vmatpush2.bf16.msra.mxu0 0
    %1038 = vmatprep.subr.bf16.mxu0 0
    %1039 = vmatpush2.bf16.msra.mxu0 0
    %1040 = vmatprep.subr.bf16.mxu0 0
    %1041 = vmatpush2.bf16.msra.mxu0 0
    %1042 = vmatprep.subr.bf16.mxu0 0
    %1043 = vmatpush2.bf16.msra.mxu0 0
    %1044 = vmatprep.subr.bf16.mxu0 0
    %1045 = vmatpush2.bf16.msra.mxu0 0
    %1046 = vmatprep.mubr.bf16.mxu0 0
    %1047 = vmatmul.mubr.bf16.gmra.mxu0 %v426
    %v1048 = vpop.f32.mrf.mxu0
    %v1049 = vadd.f32 %v1000, %v1048
    %v1050 = vpop.f32.mrf.mxu0
    %v1051 = vpop.f32.mrf.mxu0
    %v1052 = vadd.f32 %v1000, %v1051
    %v1053 = vpop.f32.mrf.mxu0
    %1054 = vdwg.mxu0
    %v1055 = vpack.c.bf16 %v1052, %v1049
    %1057 = vrot.lane.b32.xlu0 %v1055, 96
    %v1058 = vpop.permute.xlu0 %1057
    %v1060 = vsel %vm147, %v1055, 0
    %v1063 = vsel %vm147, %v1058, 0
    %1065 = vmatprep.subr.bf16.mxu0 0
    %1066 = vmatpush1.bf16.xpose.msra.mxu0 0
    %1067 = vmatprep.subr.bf16.mxu0 0
    %1068 = vmatpush1.bf16.xpose.msra.mxu0 0
    %1069 = vmatprep.subr.bf16.mxu0 0
    %1070 = vmatpush1.bf16.xpose.msra.mxu0 0
    %1071 = vmatprep.subr.bf16.mxu0 0
    %1072 = vmatpush1.bf16.xpose.msra.mxu0 0
    %1073 = vmatprep.subr.bf16.mxu0 0
    %1074 = vmatpush1.bf16.xpose.msra.mxu0 0
    %1075 = vmatprep.subr.bf16.mxu0 0
    %1076 = vmatpush1.bf16.xpose.msra.mxu0 0
    %1077 = vmatprep.subr.bf16.mxu0 0
    %1078 = vmatpush1.bf16.xpose.msra.mxu0 0
    %1079 = vmatprep.subr.bf16.mxu0 0
    %1080 = vmatpush1.bf16.xpose.msra.mxu0 %v1063
    %1081 = vmatprep.subr.bf16.mxu0 0
    %1082 = vmatpush2.bf16.xpose.msra.mxu0 0
    %1083 = vmatprep.subr.bf16.mxu0 0
    %1084 = vmatpush2.bf16.xpose.msra.mxu0 0
    %1085 = vmatprep.subr.bf16.mxu0 0
    %1086 = vmatpush2.bf16.xpose.msra.mxu0 0
    %1087 = vmatprep.subr.bf16.mxu0 0
    %1088 = vmatpush2.bf16.xpose.msra.mxu0 0
    %1089 = vmatprep.subr.bf16.mxu0 0
    %1090 = vmatpush2.bf16.xpose.msra.mxu0 0
    %1091 = vmatprep.subr.bf16.mxu0 0
    %1092 = vmatpush2.bf16.xpose.msra.mxu0 0
    %1093 = vmatprep.subr.bf16.mxu0 0
    %1094 = vmatpush2.bf16.xpose.msra.mxu0 0
    %1095 = vmatprep.subr.bf16.mxu0 0
    %1096 = vmatpush2.bf16.xpose.msra.mxu0 0
    %1097 = vmatprep.mubr.bf16.mxu0 0
    %1098 = vmatmul.mubr.bf16.gmra.mxu0 %v1060
    %v1099 = vpop.f32.mrf.mxu0
    %v1100 = vadd.f32 %v154, %v1099
    %v1101 = vpop.f32.mrf.mxu0
    %v1102 = vpop.f32.mrf.mxu0
    %v1103 = vadd.f32 %v155, %v1102
    %v1104 = vpop.f32.mrf.mxu0
    %1105 = vdwg.mxu0
    %v1106 = vsel %vm520, %v1100, -inf
    %1107 = vmax.xlane.f32.xlu0 %v1106
    %v1108 = vpop.xlane.xlu0 %1107
    %v1109 = vsel %vm520, %v1103, -inf
    %1110 = vmax.xlane.f32.xlu0 %v1109
    %v1111 = vpop.xlane.xlu0 %1110
    %v1112 = vsub.f32 %v1100, %v1108
    %v1113 = vsub.f32 %v1103, %v1111
    %v1114 = vmul.f32 %v1112, 1.442695
    %v1115 = vpow.pop %v1114
    %v1116 = vmul.f32 %v1113, 1.442695
    %v1117 = vpow.pop %v1116
    %v1118 = vsel %vm520, %v1115, 0.0
    %1119 = vadd.xlane.f32.xlu0 %v1118
    %v1120 = vpop.xlane.xlu0 %1119
    %v1121 = vsel %vm520, %v1117, 0.0
    %1122 = vadd.xlane.f32.xlu0 %v1121
    %v1123 = vpop.xlane.xlu0 %1122
    %v1124 = vrcp.pop %v1120
    %v1125 = vrcp.pop %v1123
    %v1126 = vmul.f32 %v1115, %v1124
    %v1127 = vmul.f32 %v1117, %v1125
    %v1128 = vpack.c.bf16 %v1127, %v1126
    %1129 = vrot.lane.b32.xlu0 %v1055, 64
    %v1130 = vpop.permute.xlu0 %1129
    %v1133 = vsel %vm520, %v1128, 0
    %1135 = vmatprep.subr.bf16.mxu0 0
    %1136 = vmatpush1.bf16.msra.mxu0 0
    %1137 = vmatprep.subr.bf16.mxu0 0
    %1138 = vmatpush1.bf16.msra.mxu0 0
    %1139 = vmatprep.subr.bf16.mxu0 0
    %1140 = vmatpush1.bf16.msra.mxu0 0
    %1141 = vmatprep.subr.bf16.mxu0 0
    %1142 = vmatpush1.bf16.msra.mxu0 0
    %1143 = vmatprep.subr.bf16.mxu0 0
    %1144 = vmatpush1.bf16.msra.mxu0 0
    %1145 = vmatprep.subr.bf16.mxu0 0
    %1146 = vmatpush1.bf16.msra.mxu0 0
    %1147 = vmatprep.subr.bf16.mxu0 0
    %1148 = vmatpush1.bf16.msra.mxu0 0
    %1149 = vmatprep.subr.bf16.mxu0 0
    %1150 = vmatpush1.bf16.msra.mxu0 %v1130
    %1151 = vmatprep.subr.bf16.mxu0 0
    %1152 = vmatpush2.bf16.msra.mxu0 0
    %1153 = vmatprep.subr.bf16.mxu0 0
    %1154 = vmatpush2.bf16.msra.mxu0 0
    %1155 = vmatprep.subr.bf16.mxu0 0
    %1156 = vmatpush2.bf16.msra.mxu0 0
    %1157 = vmatprep.subr.bf16.mxu0 0
    %1158 = vmatpush2.bf16.msra.mxu0 0
    %1159 = vmatprep.subr.bf16.mxu0 0
    %1160 = vmatpush2.bf16.msra.mxu0 0
    %1161 = vmatprep.subr.bf16.mxu0 0
    %1162 = vmatpush2.bf16.msra.mxu0 0
    %1163 = vmatprep.subr.bf16.mxu0 0
    %1164 = vmatpush2.bf16.msra.mxu0 0
    %1165 = vmatprep.subr.bf16.mxu0 0
    %1166 = vmatpush2.bf16.msra.mxu0 0
    %1167 = vmatprep.mubr.bf16.mxu0 0
    %1168 = vmatmul.mubr.bf16.gmra.mxu0 %v1133
    %v1169 = vpop.f32.mrf.mxu0
    %v1170 = vadd.f32 0.0, %v1169
    %v1171 = vpop.f32.mrf.mxu0
    %v1172 = vpop.f32.mrf.mxu0
    %v1173 = vadd.f32 0.0, %v1172
    %v1174 = vpop.f32.mrf.mxu0
    %1175 = vdwg.mxu0
    %1176 = vst.msk [vmem:[#allocation2] sm:$0xff] %vm147, %v1170
    %1177 = vst.msk [vmem:[#allocation2 + $0x8] sm:$0xff] %vm147, %v1173
    %1178 = vrot.lane.b32.xlu0 %v1055, 120
    %v1179 = vpop.permute.xlu0 %1178
    %1180 = vrot.lane.b32.xlu0 %v1055, 88
    %v1181 = vpop.permute.xlu0 %1180
    %v1183 = vsel %vm147, %v1179, 0
    %v1186 = vsel %vm147, %v1181, 0
    %1188 = vmatprep.subr.bf16.mxu0 0
    %1189 = vmatpush1.bf16.xpose.msra.mxu0 0
    %1190 = vmatprep.subr.bf16.mxu0 0
    %1191 = vmatpush1.bf16.xpose.msra.mxu0 0
    %1192 = vmatprep.subr.bf16.mxu0 0
    %1193 = vmatpush1.bf16.xpose.msra.mxu0 0
    %1194 = vmatprep.subr.bf16.mxu0 0
    %1195 = vmatpush1.bf16.xpose.msra.mxu0 0
    %1196 = vmatprep.subr.bf16.mxu0 0
    %1197 = vmatpush1.bf16.xpose.msra.mxu0 0
    %1198 = vmatprep.subr.bf16.mxu0 0
    %1199 = vmatpush1.bf16.xpose.msra.mxu0 0
    %1200 = vmatprep.subr.bf16.mxu0 0
    %1201 = vmatpush1.bf16.xpose.msra.mxu0 0
    %1202 = vmatprep.subr.bf16.mxu0 0
    %1203 = vmatpush1.bf16.xpose.msra.mxu0 %v1186
    %1204 = vmatprep.subr.bf16.mxu0 0
    %1205 = vmatpush2.bf16.xpose.msra.mxu0 0
    %1206 = vmatprep.subr.bf16.mxu0 0
    %1207 = vmatpush2.bf16.xpose.msra.mxu0 0
    %1208 = vmatprep.subr.bf16.mxu0 0
    %1209 = vmatpush2.bf16.xpose.msra.mxu0 0
    %1210 = vmatprep.subr.bf16.mxu0 0
    %1211 = vmatpush2.bf16.xpose.msra.mxu0 0
    %1212 = vmatprep.subr.bf16.mxu0 0
    %1213 = vmatpush2.bf16.xpose.msra.mxu0 0
    %1214 = vmatprep.subr.bf16.mxu0 0
    %1215 = vmatpush2.bf16.xpose.msra.mxu0 0
    %1216 = vmatprep.subr.bf16.mxu0 0
    %1217 = vmatpush2.bf16.xpose.msra.mxu0 0
    %1218 = vmatprep.subr.bf16.mxu0 0
    %1219 = vmatpush2.bf16.xpose.msra.mxu0 0
    %1220 = vmatprep.mubr.bf16.mxu0 0
    %1221 = vmatmul.mubr.bf16.gmra.mxu0 %v1183
    %v1222 = vpop.f32.mrf.mxu0
    %v1223 = vadd.f32 %v154, %v1222
    %v1224 = vpop.f32.mrf.mxu0
    %v1225 = vpop.f32.mrf.mxu0
    %v1226 = vadd.f32 %v155, %v1225
    %v1227 = vpop.f32.mrf.mxu0
    %1228 = vdwg.mxu0
    %v1229 = vsel %vm520, %v1223, -inf
    %1230 = vmax.xlane.f32.xlu0 %v1229
    %v1231 = vpop.xlane.xlu0 %1230
    %v1232 = vsel %vm520, %v1226, -inf
    %1233 = vmax.xlane.f32.xlu0 %v1232
    %v1234 = vpop.xlane.xlu0 %1233
    %v1235 = vsub.f32 %v1223, %v1231
    %v1236 = vsub.f32 %v1226, %v1234
    %v1237 = vmul.f32 %v1235, 1.442695
    %v1238 = vpow.pop %v1237
    %v1239 = vmul.f32 %v1236, 1.442695
    %v1240 = vpow.pop %v1239
    %v1241 = vsel %vm520, %v1238, 0.0
    %1242 = vadd.xlane.f32.xlu0 %v1241
    %v1243 = vpop.xlane.xlu0 %1242
    %v1244 = vsel %vm520, %v1240, 0.0
    %1245 = vadd.xlane.f32.xlu0 %v1244
    %v1246 = vpop.xlane.xlu0 %1245
    %v1247 = vrcp.pop %v1243
    %v1248 = vrcp.pop %v1246
    %v1249 = vmul.f32 %v1238, %v1247
    %v1250 = vmul.f32 %v1240, %v1248
    %v1251 = vpack.c.bf16 %v1250, %v1249
    %1252 = vrot.lane.b32.xlu0 %v1055, 56
    %v1253 = vpop.permute.xlu0 %1252
    %v1256 = vsel %vm520, %v1251, 0
    %1258 = vmatprep.subr.bf16.mxu0 0
    %1259 = vmatpush1.bf16.msra.mxu0 0
    %1260 = vmatprep.subr.bf16.mxu0 0
    %1261 = vmatpush1.bf16.msra.mxu0 0
    %1262 = vmatprep.subr.bf16.mxu0 0
    %1263 = vmatpush1.bf16.msra.mxu0 0
    %1264 = vmatprep.subr.bf16.mxu0 0
    %1265 = vmatpush1.bf16.msra.mxu0 0
    %1266 = vmatprep.subr.bf16.mxu0 0
    %1267 = vmatpush1.bf16.msra.mxu0 0
    %1268 = vmatprep.subr.bf16.mxu0 0
    %1269 = vmatpush1.bf16.msra.mxu0 0
    %1270 = vmatprep.subr.bf16.mxu0 0
    %1271 = vmatpush1.bf16.msra.mxu0 0
    %1272 = vmatprep.subr.bf16.mxu0 0
    %1273 = vmatpush1.bf16.msra.mxu0 %v1253
    %1274 = vmatprep.subr.bf16.mxu0 0
    %1275 = vmatpush2.bf16.msra.mxu0 0
    %1276 = vmatprep.subr.bf16.mxu0 0
    %1277 = vmatpush2.bf16.msra.mxu0 0
    %1278 = vmatprep.subr.bf16.mxu0 0
    %1279 = vmatpush2.bf16.msra.mxu0 0
    %1280 = vmatprep.subr.bf16.mxu0 0
    %1281 = vmatpush2.bf16.msra.mxu0 0
    %1282 = vmatprep.subr.bf16.mxu0 0
    %1283 = vmatpush2.bf16.msra.mxu0 0
    %1284 = vmatprep.subr.bf16.mxu0 0
    %1285 = vmatpush2.bf16.msra.mxu0 0
    %1286 = vmatprep.subr.bf16.mxu0 0
    %1287 = vmatpush2.bf16.msra.mxu0 0
    %1288 = vmatprep.subr.bf16.mxu0 0
    %1289 = vmatpush2.bf16.msra.mxu0 0
    %1290 = vmatprep.mubr.bf16.mxu0 0
    %1291 = vmatmul.mubr.bf16.gmra.mxu0 %v1256
    %v1292 = vpop.f32.mrf.mxu0
    %v1293 = vadd.f32 0.0, %v1292
    %v1294 = vpop.f32.mrf.mxu0
    %v1295 = vpop.f32.mrf.mxu0
    %v1296 = vadd.f32 0.0, %v1295
    %v1297 = vpop.f32.mrf.mxu0
    %1298 = vdwg.mxu0
    %1301 = vrot.lane.b32.xlu0 %v1293, 8
    %v1302 = vpop.permute.xlu0 %1301
    %1303 = vrot.lane.b32.xlu0 %v1296, 8
    %v1304 = vpop.permute.xlu0 %1303
    %1307 = vst.msk [vmem:[#allocation2] sm:$0xff] %vm722, %v1302
    %1308 = vst.msk [vmem:[#allocation2 + $0x8] sm:$0xff] %vm722, %v1304
    %1309 = vrot.lane.b32.xlu0 %v1055, 112
    %v1310 = vpop.permute.xlu0 %1309
    %1311 = vrot.lane.b32.xlu0 %v1055, 80
    %v1312 = vpop.permute.xlu0 %1311
    %v1314 = vsel %vm147, %v1310, 0
    %v1317 = vsel %vm147, %v1312, 0
    %1319 = vmatprep.subr.bf16.mxu0 0
    %1320 = vmatpush1.bf16.xpose.msra.mxu0 0
    %1321 = vmatprep.subr.bf16.mxu0 0
    %1322 = vmatpush1.bf16.xpose.msra.mxu0 0
    %1323 = vmatprep.subr.bf16.mxu0 0
    %1324 = vmatpush1.bf16.xpose.msra.mxu0 0
    %1325 = vmatprep.subr.bf16.mxu0 0
    %1326 = vmatpush1.bf16.xpose.msra.mxu0 0
    %1327 = vmatprep.subr.bf16.mxu0 0
    %1328 = vmatpush1.bf16.xpose.msra.mxu0 0
    %1329 = vmatprep.subr.bf16.mxu0 0
    %1330 = vmatpush1.bf16.xpose.msra.mxu0 0
    %1331 = vmatprep.subr.bf16.mxu0 0
    %1332 = vmatpush1.bf16.xpose.msra.mxu0 0
    %1333 = vmatprep.subr.bf16.mxu0 0
    %1334 = vmatpush1.bf16.xpose.msra.mxu0 %v1317
    %1335 = vmatprep.subr.bf16.mxu0 0
    %1336 = vmatpush2.bf16.xpose.msra.mxu0 0
    %1337 = vmatprep.subr.bf16.mxu0 0
    %1338 = vmatpush2.bf16.xpose.msra.mxu0 0
    %1339 = vmatprep.subr.bf16.mxu0 0
    %1340 = vmatpush2.bf16.xpose.msra.mxu0 0
    %1341 = vmatprep.subr.bf16.mxu0 0
    %1342 = vmatpush2.bf16.xpose.msra.mxu0 0
    %1343 = vmatprep.subr.bf16.mxu0 0
    %1344 = vmatpush2.bf16.xpose.msra.mxu0 0
    %1345 = vmatprep.subr.bf16.mxu0 0
    %1346 = vmatpush2.bf16.xpose.msra.mxu0 0
    %1347 = vmatprep.subr.bf16.mxu0 0
    %1348 = vmatpush2.bf16.xpose.msra.mxu0 0
    %1349 = vmatprep.subr.bf16.mxu0 0
    %1350 = vmatpush2.bf16.xpose.msra.mxu0 0
    %1351 = vmatprep.mubr.bf16.mxu0 0
    %1352 = vmatmul.mubr.bf16.gmra.mxu0 %v1314
    %v1353 = vpop.f32.mrf.mxu0
    %v1354 = vadd.f32 %v154, %v1353
    %v1355 = vpop.f32.mrf.mxu0
    %v1356 = vpop.f32.mrf.mxu0
    %v1357 = vadd.f32 %v155, %v1356
    %v1358 = vpop.f32.mrf.mxu0
    %1359 = vdwg.mxu0
    %v1360 = vsel %vm520, %v1354, -inf
    %1361 = vmax.xlane.f32.xlu0 %v1360
    %v1362 = vpop.xlane.xlu0 %1361
    %v1363 = vsel %vm520, %v1357, -inf
    %1364 = vmax.xlane.f32.xlu0 %v1363
    %v1365 = vpop.xlane.xlu0 %1364
    %v1366 = vsub.f32 %v1354, %v1362
    %v1367 = vsub.f32 %v1357, %v1365
    %v1368 = vmul.f32 %v1366, 1.442695
    %v1369 = vpow.pop %v1368
    %v1370 = vmul.f32 %v1367, 1.442695
    %v1371 = vpow.pop %v1370
    %v1372 = vsel %vm520, %v1369, 0.0
    %1373 = vadd.xlane.f32.xlu0 %v1372
    %v1374 = vpop.xlane.xlu0 %1373
    %v1375 = vsel %vm520, %v1371, 0.0
    %1376 = vadd.xlane.f32.xlu0 %v1375
    %v1377 = vpop.xlane.xlu0 %1376
    %v1378 = vrcp.pop %v1374
    %v1379 = vrcp.pop %v1377
    %v1380 = vmul.f32 %v1369, %v1378
    %v1381 = vmul.f32 %v1371, %v1379
    %v1382 = vpack.c.bf16 %v1381, %v1380
    %1383 = vrot.lane.b32.xlu0 %v1055, 48
    %v1384 = vpop.permute.xlu0 %1383
    %v1387 = vsel %vm520, %v1382, 0
    %1389 = vmatprep.subr.bf16.mxu0 0
    %1390 = vmatpush1.bf16.msra.mxu0 0
    %1391 = vmatprep.subr.bf16.mxu0 0
    %1392 = vmatpush1.bf16.msra.mxu0 0
    %1393 = vmatprep.subr.bf16.mxu0 0
    %1394 = vmatpush1.bf16.msra.mxu0 0
    %1395 = vmatprep.subr.bf16.mxu0 0
    %1396 = vmatpush1.bf16.msra.mxu0 0
    %1397 = vmatprep.subr.bf16.mxu0 0
    %1398 = vmatpush1.bf16.msra.mxu0 0
    %1399 = vmatprep.subr.bf16.mxu0 0
    %1400 = vmatpush1.bf16.msra.mxu0 0
    %1401 = vmatprep.subr.bf16.mxu0 0
    %1402 = vmatpush1.bf16.msra.mxu0 0
    %1403 = vmatprep.subr.bf16.mxu0 0
    %1404 = vmatpush1.bf16.msra.mxu0 %v1384
    %1405 = vmatprep.subr.bf16.mxu0 0
    %1406 = vmatpush2.bf16.msra.mxu0 0
    %1407 = vmatprep.subr.bf16.mxu0 0
    %1408 = vmatpush2.bf16.msra.mxu0 0
    %1409 = vmatprep.subr.bf16.mxu0 0
    %1410 = vmatpush2.bf16.msra.mxu0 0
    %1411 = vmatprep.subr.bf16.mxu0 0
    %1412 = vmatpush2.bf16.msra.mxu0 0
    %1413 = vmatprep.subr.bf16.mxu0 0
    %1414 = vmatpush2.bf16.msra.mxu0 0
    %1415 = vmatprep.subr.bf16.mxu0 0
    %1416 = vmatpush2.bf16.msra.mxu0 0
    %1417 = vmatprep.subr.bf16.mxu0 0
    %1418 = vmatpush2.bf16.msra.mxu0 0
    %1419 = vmatprep.subr.bf16.mxu0 0
    %1420 = vmatpush2.bf16.msra.mxu0 0
    %1421 = vmatprep.mubr.bf16.mxu0 0
    %1422 = vmatmul.mubr.bf16.gmra.mxu0 %v1387
    %v1423 = vpop.f32.mrf.mxu0
    %v1424 = vadd.f32 0.0, %v1423
    %v1425 = vpop.f32.mrf.mxu0
    %v1426 = vpop.f32.mrf.mxu0
    %v1427 = vadd.f32 0.0, %v1426
    %v1428 = vpop.f32.mrf.mxu0
    %1429 = vdwg.mxu0
    %1432 = vrot.lane.b32.xlu0 %v1424, 16
    %v1433 = vpop.permute.xlu0 %1432
    %1434 = vrot.lane.b32.xlu0 %v1427, 16
    %v1435 = vpop.permute.xlu0 %1434
    %1438 = vst.msk [vmem:[#allocation2] sm:$0xff] %vm854, %v1433
    %1439 = vst.msk [vmem:[#allocation2 + $0x8] sm:$0xff] %vm854, %v1435
    %1440 = vrot.lane.b32.xlu0 %v1055, 104
    %v1441 = vpop.permute.xlu0 %1440
    %1442 = vrot.lane.b32.xlu0 %v1055, 72
    %v1443 = vpop.permute.xlu0 %1442
    %v1445 = vsel %vm147, %v1441, 0
    %v1448 = vsel %vm147, %v1443, 0
    %1450 = vmatprep.subr.bf16.mxu0 0
    %1451 = vmatpush1.bf16.xpose.msra.mxu0 0
    %1452 = vmatprep.subr.bf16.mxu0 0
    %1453 = vmatpush1.bf16.xpose.msra.mxu0 0
    %1454 = vmatprep.subr.bf16.mxu0 0
    %1455 = vmatpush1.bf16.xpose.msra.mxu0 0
    %1456 = vmatprep.subr.bf16.mxu0 0
    %1457 = vmatpush1.bf16.xpose.msra.mxu0 0
    %1458 = vmatprep.subr.bf16.mxu0 0
    %1459 = vmatpush1.bf16.xpose.msra.mxu0 0
    %1460 = vmatprep.subr.bf16.mxu0 0
    %1461 = vmatpush1.bf16.xpose.msra.mxu0 0
    %1462 = vmatprep.subr.bf16.mxu0 0
    %1463 = vmatpush1.bf16.xpose.msra.mxu0 0
    %1464 = vmatprep.subr.bf16.mxu0 0
    %1465 = vmatpush1.bf16.xpose.msra.mxu0 %v1448
    %1466 = vmatprep.subr.bf16.mxu0 0
    %1467 = vmatpush2.bf16.xpose.msra.mxu0 0
    %1468 = vmatprep.subr.bf16.mxu0 0
    %1469 = vmatpush2.bf16.xpose.msra.mxu0 0
    %1470 = vmatprep.subr.bf16.mxu0 0
    %1471 = vmatpush2.bf16.xpose.msra.mxu0 0
    %1472 = vmatprep.subr.bf16.mxu0 0
    %1473 = vmatpush2.bf16.xpose.msra.mxu0 0
    %1474 = vmatprep.subr.bf16.mxu0 0
    %1475 = vmatpush2.bf16.xpose.msra.mxu0 0
    %1476 = vmatprep.subr.bf16.mxu0 0
    %1477 = vmatpush2.bf16.xpose.msra.mxu0 0
    %1478 = vmatprep.subr.bf16.mxu0 0
    %1479 = vmatpush2.bf16.xpose.msra.mxu0 0
    %1480 = vmatprep.subr.bf16.mxu0 0
    %1481 = vmatpush2.bf16.xpose.msra.mxu0 0
    %1482 = vmatprep.mubr.bf16.mxu0 0
    %1483 = vmatmul.mubr.bf16.gmra.mxu0 %v1445
    %v1484 = vpop.f32.mrf.mxu0
    %v1485 = vadd.f32 %v154, %v1484
    %v1486 = vpop.f32.mrf.mxu0
    %v1487 = vpop.f32.mrf.mxu0
    %v1488 = vadd.f32 %v155, %v1487
    %v1489 = vpop.f32.mrf.mxu0
    %1490 = vdwg.mxu0
    %v1491 = vsel %vm520, %v1485, -inf
    %1492 = vmax.xlane.f32.xlu0 %v1491
    %v1493 = vpop.xlane.xlu0 %1492
    %v1494 = vsel %vm520, %v1488, -inf
    %1495 = vmax.xlane.f32.xlu0 %v1494
    %v1496 = vpop.xlane.xlu0 %1495
    %v1497 = vsub.f32 %v1485, %v1493
    %v1498 = vsub.f32 %v1488, %v1496
    %v1499 = vmul.f32 %v1497, 1.442695
    %v1500 = vpow.pop %v1499
    %v1501 = vmul.f32 %v1498, 1.442695
    %v1502 = vpow.pop %v1501
    %v1503 = vsel %vm520, %v1500, 0.0
    %1504 = vadd.xlane.f32.xlu0 %v1503
    %v1505 = vpop.xlane.xlu0 %1504
    %v1506 = vsel %vm520, %v1502, 0.0
    %1507 = vadd.xlane.f32.xlu0 %v1506
    %v1508 = vpop.xlane.xlu0 %1507
    %v1509 = vrcp.pop %v1505
    %v1510 = vrcp.pop %v1508
    %v1511 = vmul.f32 %v1500, %v1509
    %v1512 = vmul.f32 %v1502, %v1510
    %v1513 = vpack.c.bf16 %v1512, %v1511
    %1514 = vrot.lane.b32.xlu0 %v1055, 40
    %v1515 = vpop.permute.xlu0 %1514
    %v1518 = vsel %vm520, %v1513, 0
    %1520 = vmatprep.subr.bf16.mxu0 0
    %1521 = vmatpush1.bf16.msra.mxu0 0
    %1522 = vmatprep.subr.bf16.mxu0 0
    %1523 = vmatpush1.bf16.msra.mxu0 0
    %1524 = vmatprep.subr.bf16.mxu0 0
    %1525 = vmatpush1.bf16.msra.mxu0 0
    %1526 = vmatprep.subr.bf16.mxu0 0
    %1527 = vmatpush1.bf16.msra.mxu0 0
    %1528 = vmatprep.subr.bf16.mxu0 0
    %1529 = vmatpush1.bf16.msra.mxu0 0
    %1530 = vmatprep.subr.bf16.mxu0 0
    %1531 = vmatpush1.bf16.msra.mxu0 0
    %1532 = vmatprep.subr.bf16.mxu0 0
    %1533 = vmatpush1.bf16.msra.mxu0 0
    %1534 = vmatprep.subr.bf16.mxu0 0
    %1535 = vmatpush1.bf16.msra.mxu0 %v1515
    %1536 = vmatprep.subr.bf16.mxu0 0
    %1537 = vmatpush2.bf16.msra.mxu0 0
    %1538 = vmatprep.subr.bf16.mxu0 0
    %1539 = vmatpush2.bf16.msra.mxu0 0
    %1540 = vmatprep.subr.bf16.mxu0 0
    %1541 = vmatpush2.bf16.msra.mxu0 0
    %1542 = vmatprep.subr.bf16.mxu0 0
    %1543 = vmatpush2.bf16.msra.mxu0 0
    %1544 = vmatprep.subr.bf16.mxu0 0
    %1545 = vmatpush2.bf16.msra.mxu0 0
    %1546 = vmatprep.subr.bf16.mxu0 0
    %1547 = vmatpush2.bf16.msra.mxu0 0
    %1548 = vmatprep.subr.bf16.mxu0 0
    %1549 = vmatpush2.bf16.msra.mxu0 0
    %1550 = vmatprep.subr.bf16.mxu0 0
    %1551 = vmatpush2.bf16.msra.mxu0 0
    %1552 = vmatprep.mubr.bf16.mxu0 0
    %1553 = vmatmul.mubr.bf16.gmra.mxu0 %v1518
    %v1554 = vpop.f32.mrf.mxu0
    %v1555 = vadd.f32 0.0, %v1554
    %v1556 = vpop.f32.mrf.mxu0
    %v1557 = vpop.f32.mrf.mxu0
    %v1558 = vadd.f32 0.0, %v1557
    %v1559 = vpop.f32.mrf.mxu0
    %1560 = vdwg.mxu0
    %1563 = vrot.lane.b32.xlu0 %v1555, 24
    %v1564 = vpop.permute.xlu0 %1563
    %1565 = vrot.lane.b32.xlu0 %v1558, 24
    %v1566 = vpop.permute.xlu0 %1565
    %1569 = vst.msk [vmem:[#allocation2] sm:$0xff] %vm986, %v1564
    %1570 = vst.msk [vmem:[#allocation2 + $0x8] sm:$0xff] %vm986, %v1566
    %v1571 = vld [vmem:[#allocation2] sm:$0xff]
    %v1572 = vld [vmem:[#allocation2 + $0x8] sm:$0xff]
    %v1573 = vpack.c.bf16 %v1572, %v1571
    %s1574 = scalar_lea.vmem %s13, 16
    %v1575 = vld [vmem:[%s1574] sm:$0xf]
    %v1576 = vld [vmem:[%s1574 + $0x4] sm:$0xf]
    %v1577 = vld [vmem:[%s1574 + $0x8] sm:$0xf]
    %v1578 = vld [vmem:[%s1574 + $0xc] sm:$0xf]
    %s1579 = scalar_lea.vmem %s14, 1
    %v1580 = vld [vmem:[%s1579] sm:$0x1]
    %v1582 = vlaneseq
    %v1583 = vshrl.u32 %v1582, 7
    %v1584 = vsub.s32 0, %v1583
    %v1585 = vrot.slane %v1580, %v1584
    %v1591 = vunpack.c.l.b16 %v1575
    %v1592 = vunpack.c.l.b16 %v1576
    %v1593 = vunpack.c.l.b16 %v1577
    %v1594 = vunpack.c.l.b16 %v1578
    %v1595 = vpack.c.b16 %v1592, %v1591
    %v1596 = vpack.c.b16 %v1594, %v1593
    %v1600 = vsel %vm285, %v1573, 0
    %1602 = vmatprep.subr.bf16.mxu0 0
    %1603 = vmatpush1.bf16.msra.mxu0 0
    %1604 = vmatprep.subr.bf16.mxu0 0
    %1605 = vmatpush1.bf16.msra.mxu0 0
    %1606 = vmatprep.subr.bf16.mxu0 0
    %1607 = vmatpush1.bf16.msra.mxu0 0
    %1608 = vmatprep.subr.bf16.mxu0 0
    %1609 = vmatpush1.bf16.msra.mxu0 0
    %1610 = vmatprep.subr.bf16.mxu0 0
    %1611 = vmatpush1.bf16.msra.mxu0 0
    %1612 = vmatprep.subr.bf16.mxu0 0
    %1613 = vmatpush1.bf16.msra.mxu0 0
    %1614 = vmatprep.subr.bf16.mxu0 0
    %1615 = vmatpush1.bf16.msra.mxu0 %v1596
    %1616 = vmatprep.subr.bf16.mxu0 0
    %1617 = vmatpush1.bf16.msra.mxu0 %v1595
    %1618 = vmatprep.subr.bf16.mxu0 0
    %1619 = vmatpush2.bf16.msra.mxu0 0
    %1620 = vmatprep.subr.bf16.mxu0 0
    %1621 = vmatpush2.bf16.msra.mxu0 0
    %1622 = vmatprep.subr.bf16.mxu0 0
    %1623 = vmatpush2.bf16.msra.mxu0 0
    %1624 = vmatprep.subr.bf16.mxu0 0
    %1625 = vmatpush2.bf16.msra.mxu0 0
    %1626 = vmatprep.subr.bf16.mxu0 0
    %1627 = vmatpush2.bf16.msra.mxu0 0
    %1628 = vmatprep.subr.bf16.mxu0 0
    %1629 = vmatpush2.bf16.msra.mxu0 0
    %1630 = vmatprep.subr.bf16.mxu0 0
    %1631 = vmatpush2.bf16.msra.mxu0 0
    %1632 = vmatprep.subr.bf16.mxu0 0
    %1633 = vmatpush2.bf16.msra.mxu0 0
    %1634 = vmatprep.mubr.bf16.mxu0 0
    %1635 = vmatmul.mubr.bf16.gmra.mxu0 %v1600
    %v1636 = vpop.f32.mrf.mxu0
    %v1637 = vadd.f32 %v1585, %v1636
    %v1638 = vpop.f32.mrf.mxu0
    %v1639 = vpop.f32.mrf.mxu0
    %v1640 = vadd.f32 %v1585, %v1639
    %v1641 = vpop.f32.mrf.mxu0
    %1642 = vdwg.mxu0
    %v1643 = vadd.f32 %v399, %v1637
    %v1644 = vadd.f32 %v400, %v1640
    %s1645 = scalar_lea.vmem %s15, 1
    %v1646 = vld [vmem:[%s1645] sm:$0x1]
    %s1647 = scalar_lea.vmem %s16, 1
    %v1648 = vld [vmem:[%s1647] sm:$0x1]
    %v1649 = vsel %vm285, %v1643, 0.0
    %1650 = vadd.xlane.f32.xlu0 %v1649
    %v1651 = vpop.xlane.xlu0 %1650
    %v1652 = vsel %vm285, %v1644, 0.0
    %1653 = vadd.xlane.f32.xlu0 %v1652
    %v1654 = vpop.xlane.xlu0 %1653
    %v1655 = vmul.f32 %v1651, %v292
    %v1656 = vmul.f32 %v1654, %v292
    %v1657 = vsub.f32 %v1643, %v1655
    %v1658 = vsub.f32 %v1644, %v1656
    %v1659 = vmul.f32 %v1657, %v1657
    %v1660 = vmul.f32 %v1658, %v1658
    %v1661 = vsel %vm285, %v1659, 0.0
    %1662 = vadd.xlane.f32.xlu0 %v1661
    %v1663 = vpop.xlane.xlu0 %1662
    %v1664 = vsel %vm285, %v1660, 0.0
    %1665 = vadd.xlane.f32.xlu0 %v1664
    %v1666 = vpop.xlane.xlu0 %1665
    %v1667 = vmul.f32 %v1663, %v292
    %v1668 = vmul.f32 %v1666, %v292
    %v1669 = vadd.f32 %v1667, 1e-05
    %v1670 = vadd.f32 %v1668, 1e-05
    %v1671 = vrsqrt.pop %v1669
    %v1672 = vrsqrt.pop %v1670
    %v1673 = vmul.f32 %v1657, %v1671
    %v1674 = vmul.f32 %v1658, %v1672
    %v1676 = vlaneseq
    %v1677 = vshrl.u32 %v1676, 7
    %v1678 = vsub.s32 0, %v1677
    %v1679 = vrot.slane %v1646, %v1678
    %v1681 = vmul.f32 %v1673, %v1679
    %v1682 = vmul.f32 %v1674, %v1679
    %v1684 = vlaneseq
    %v1685 = vshrl.u32 %v1684, 7
    %v1686 = vsub.s32 0, %v1685
    %v1687 = vrot.slane %v1648, %v1686
    %v1689 = vadd.f32 %v1681, %v1687
    %v1690 = vadd.f32 %v1682, %v1687
    %v1691 = vpack.c.bf16 %v1690, %v1689
    %s1692 = scalar_lea.vmem %s17, 16
    %v1693 = vld [vmem:[%s1692] sm:$0xf]
    %v1694 = vld [vmem:[%s1692 + $0x4] sm:$0xf]
    %v1695 = vld [vmem:[%s1692 + $0x8] sm:$0xf]
    %v1696 = vld [vmem:[%s1692 + $0xc] sm:$0xf]
    %s1697 = scalar_lea.vmem [#allocation8], 1
    %v1698 = vld [vmem:[%s1697] sm:$0x1]
    %v1700 = vlaneseq
    %v1701 = vshrl.u32 %v1700, 7
    %v1702 = vsub.s32 0, %v1701
    %v1703 = vrot.slane %v1698, %v1702
    %v1709 = vunpack.c.l.b16 %v1693
    %v1710 = vunpack.c.l.b16 %v1694
    %v1711 = vunpack.c.l.b16 %v1695
    %v1712 = vunpack.c.l.b16 %v1696
    %v1713 = vpack.c.b16 %v1710, %v1709
    %v1714 = vpack.c.b16 %v1712, %v1711
    %v1718 = vsel %vm285, %v1691, 0
    %1720 = vmatprep.subr.bf16.mxu0 0
    %1721 = vmatpush1.bf16.msra.mxu0 0
    %1722 = vmatprep.subr.bf16.mxu0 0
    %1723 = vmatpush1.bf16.msra.mxu0 0
    %1724 = vmatprep.subr.bf16.mxu0 0
    %1725 = vmatpush1.bf16.msra.mxu0 0
    %1726 = vmatprep.subr.bf16.mxu0 0
    %1727 = vmatpush1.bf16.msra.mxu0 0
    %1728 = vmatprep.subr.bf16.mxu0 0
    %1729 = vmatpush1.bf16.msra.mxu0 0
    %1730 = vmatprep.subr.bf16.mxu0 0
    %1731 = vmatpush1.bf16.msra.mxu0 0
    %1732 = vmatprep.subr.bf16.mxu0 0
    %1733 = vmatpush1.bf16.msra.mxu0 %v1714
    %1734 = vmatprep.subr.bf16.mxu0 0
    %1735 = vmatpush1.bf16.msra.mxu0 %v1713
    %1736 = vmatprep.subr.bf16.mxu0 0
    %1737 = vmatpush2.bf16.msra.mxu0 0
    %1738 = vmatprep.subr.bf16.mxu0 0
    %1739 = vmatpush2.bf16.msra.mxu0 0
    %1740 = vmatprep.subr.bf16.mxu0 0
    %1741 = vmatpush2.bf16.msra.mxu0 0
    %1742 = vmatprep.subr.bf16.mxu0 0
    %1743 = vmatpush2.bf16.msra.mxu0 0
    %1744 = vmatprep.subr.bf16.mxu0 0
    %1745 = vmatpush2.bf16.msra.mxu0 0
    %1746 = vmatprep.subr.bf16.mxu0 0
    %1747 = vmatpush2.bf16.msra.mxu0 0
    %1748 = vmatprep.subr.bf16.mxu0 0
    %1749 = vmatpush2.bf16.msra.mxu0 0
    %1750 = vmatprep.subr.bf16.mxu0 0
    %1751 = vmatpush2.bf16.msra.mxu0 0
    %1752 = vmatprep.mubr.bf16.mxu0 0
    %1753 = vmatmul.mubr.bf16.gmra.mxu0 %v1718
    %v1754 = vpop.f32.mrf.mxu0
    %v1755 = vadd.f32 %v1703, %v1754
    %v1756 = vpop.f32.mrf.mxu0
    %v1757 = vpop.f32.mrf.mxu0
    %v1758 = vadd.f32 %v1703, %v1757
    %v1759 = vpop.f32.mrf.mxu0
    %1760 = vdwg.mxu0
    %v1761 = vmax.f32 %v1755, 0.0
    %v1762 = vmax.f32 %v1758, 0.0
    %v1763 = vpack.c.bf16 %v1762, %v1761
    %s1764 = scalar_lea.vmem %s19, 32
    %v1765 = vld [vmem:[%s1764] sm:$0xf]
    %v1766 = vld [vmem:[%s1764 + $0x4] sm:$0xf]
    %v1767 = vld [vmem:[%s1764 + $0x8] sm:$0xf]
    %v1768 = vld [vmem:[%s1764 + $0xc] sm:$0xf]
    %v1769 = vld [vmem:[%s1764 + $0x10] sm:$0xf]
    %v1770 = vld [vmem:[%s1764 + $0x14] sm:$0xf]
    %v1771 = vld [vmem:[%s1764 + $0x18] sm:$0xf]
    %v1772 = vld [vmem:[%s1764 + $0x1c] sm:$0xf]
    %s1773 = scalar_lea.vmem [#allocation9], 1
    %v1774 = vld [vmem:[%s1773] sm:$0x1]
    %v1776 = vlaneseq
    %v1777 = vshrl.u32 %v1776, 7
    %v1778 = vsub.s32 0, %v1777
    %v1779 = vrot.slane %v1774, %v1778
    %v1789 = vunpack.c.l.b16 %v1765
    %v1790 = vunpack.c.l.b16 %v1766
    %v1791 = vunpack.c.l.b16 %v1767
    %v1792 = vunpack.c.l.b16 %v1768
    %v1793 = vunpack.c.l.b16 %v1769
    %v1794 = vunpack.c.l.b16 %v1770
    %v1795 = vunpack.c.l.b16 %v1771
    %v1796 = vunpack.c.l.b16 %v1772
    %v1797 = vpack.c.b16 %v1790, %v1789
    %v1798 = vpack.c.b16 %v1792, %v1791
    %v1799 = vpack.c.b16 %v1794, %v1793
    %v1800 = vpack.c.b16 %v1796, %v1795
    %vm1805 = vcmask 523264
    %v1807 = vsel %vm1805, %v1763, 0
    %1809 = vmatprep.subr.bf16.mxu0 0
    %1810 = vmatpush1.bf16.msra.mxu0 0
    %1811 = vmatprep.subr.bf16.mxu0 0
    %1812 = vmatpush1.bf16.msra.mxu0 0
    %1813 = vmatprep.subr.bf16.mxu0 0
    %1814 = vmatpush1.bf16.msra.mxu0 0
    %1815 = vmatprep.subr.bf16.mxu0 0
    %1816 = vmatpush1.bf16.msra.mxu0 0
    %1817 = vmatprep.subr.bf16.mxu0 0
    %1818 = vmatpush1.bf16.msra.mxu0 %v1800
    %1819 = vmatprep.subr.bf16.mxu0 0
    %1820 = vmatpush1.bf16.msra.mxu0 %v1799
    %1821 = vmatprep.subr.bf16.mxu0 0
    %1822 = vmatpush1.bf16.msra.mxu0 %v1798
    %1823 = vmatprep.subr.bf16.mxu0 0
    %1824 = vmatpush1.bf16.msra.mxu0 %v1797
    %1825 = vmatprep.subr.bf16.mxu0 0
    %1826 = vmatpush2.bf16.msra.mxu0 0
    %1827 = vmatprep.subr.bf16.mxu0 0
    %1828 = vmatpush2.bf16.msra.mxu0 0
    %1829 = vmatprep.subr.bf16.mxu0 0
    %1830 = vmatpush2.bf16.msra.mxu0 0
    %1831 = vmatprep.subr.bf16.mxu0 0
    %1832 = vmatpush2.bf16.msra.mxu0 0
    %1833 = vmatprep.subr.bf16.mxu0 0
    %1834 = vmatpush2.bf16.msra.mxu0 0
    %1835 = vmatprep.subr.bf16.mxu0 0
    %1836 = vmatpush2.bf16.msra.mxu0 0
    %1837 = vmatprep.subr.bf16.mxu0 0
    %1838 = vmatpush2.bf16.msra.mxu0 0
    %1839 = vmatprep.subr.bf16.mxu0 0
    %1840 = vmatpush2.bf16.msra.mxu0 0
    %1841 = vmatprep.mubr.bf16.mxu0 0
    %1842 = vmatmul.mubr.bf16.gmra.mxu0 %v1807
    %v1843 = vpop.f32.mrf.mxu0
    %v1844 = vadd.f32 %v1779, %v1843
    %v1845 = vpop.f32.mrf.mxu0
    %v1846 = vpop.f32.mrf.mxu0
    %v1847 = vadd.f32 %v1779, %v1846
    %v1848 = vpop.f32.mrf.mxu0
    %1849 = vdwg.mxu0
    %v1850 = vadd.f32 %v1689, %v1844
    %v1851 = vadd.f32 %v1690, %v1847
    %s1852 = scalar_lea.vmem %s21, 1
    %v1853 = vld [vmem:[%s1852] sm:$0x1]
    %s1854 = scalar_lea.vmem %s22, 1
    %v1855 = vld [vmem:[%s1854] sm:$0x1]
    %v1856 = vsel %vm285, %v1850, 0.0
    %1857 = vadd.xlane.f32.xlu0 %v1856
    %v1858 = vpop.xlane.xlu0 %1857
    %v1859 = vsel %vm285, %v1851, 0.0
    %1860 = vadd.xlane.f32.xlu0 %v1859
    %v1861 = vpop.xlane.xlu0 %1860
    %v1862 = vmul.f32 %v1858, %v292
    %v1863 = vmul.f32 %v1861, %v292
    %v1864 = vsub.f32 %v1850, %v1862
    %v1865 = vsub.f32 %v1851, %v1863
    %v1866 = vmul.f32 %v1864, %v1864
    %v1867 = vmul.f32 %v1865, %v1865
    %v1868 = vsel %vm285, %v1866, 0.0
    %1869 = vadd.xlane.f32.xlu0 %v1868
    %v1870 = vpop.xlane.xlu0 %1869
    %v1871 = vsel %vm285, %v1867, 0.0
    %1872 = vadd.xlane.f32.xlu0 %v1871
    %v1873 = vpop.xlane.xlu0 %1872
    %v1874 = vmul.f32 %v1870, %v292
    %v1875 = vmul.f32 %v1873, %v292
    %v1876 = vadd.f32 %v1874, 1e-05
    %v1877 = vadd.f32 %v1875, 1e-05
    %v1878 = vrsqrt.pop %v1876
    %v1879 = vrsqrt.pop %v1877
    %v1880 = vmul.f32 %v1864, %v1878
    %v1881 = vmul.f32 %v1865, %v1879
    %v1883 = vlaneseq
    %v1884 = vshrl.u32 %v1883, 7
    %v1885 = vsub.s32 0, %v1884
    %v1886 = vrot.slane %v1853, %v1885
    %v1888 = vmul.f32 %v1880, %v1886
    %v1889 = vmul.f32 %v1881, %v1886
    %v1891 = vlaneseq
    %v1892 = vshrl.u32 %v1891, 7
    %v1893 = vsub.s32 0, %v1892
    %v1894 = vrot.slane %v1855, %v1893
    %v1896 = vadd.f32 %v1888, %v1894
    %v1897 = vadd.f32 %v1889, %v1894
    %1898 = vst.msk [vmem:[#allocation11] sm:$0xff] %vm285, %v1896
    %1899 = vst.msk [vmem:[#allocation11 + $0x8] sm:$0xff] %vm285, %v1897
    // Predicated region
    $region110: #{decoder_forward.1} parent=1 // pred_check
      _
    $region111: #{decoder_forward.1} parent=1 // pred_check_branch
      %1901 = sbr.rel (0) target = $region113
    $region112: #{decoder_forward.1} parent=1 // pred_region
      %s1903 = ssub.s32 256, 256
      %1904 = vsyncadd [#allocation5], %s1903
      %s1905 = sshll.u32 [#allocation11], 4
      %s1906 = int_to_ptr.vmem [resolvable:$true] %s1905
      %1911 = dma.vmem_to_hbm [thread:$0]  %s1906, 256, %s23, [#allocation5], 128, 128, 8
    $region113: #{decoder_forward.1} parent=1 // pred_fallthru
      _
    // Predicated region
    $region114: #{decoder_forward.1} parent=1 // pred_check
      _
    $region115: #{decoder_forward.1} parent=1 // pred_check_branch
      %1913 = sbr.rel (0) target = $region117
    $region116: #{decoder_forward.1} parent=1 // pred_region
      %1914 = dma.done [#allocation5], 256
    $region117: #{decoder_forward.1} parent=1 // pred_fallthru
      _
    %1915 = vsyncpa [#allocation4], 1
    %1916 = vsyncpa [#allocation7], 1
    %1917 = vsyncpa [#allocation10], 1
    %1918 = vsyncpa [#allocation5], 1

</llo_original>
